<compile_context>
chip_gen: v5e
topology: v5e:2x2
jax: 0.10.0
libtpu: 0.0.40
codegen_flags: <defaults>
</compile_context>

<pallas_src>
import jax
import jax.numpy as jnp
from jax.experimental import pallas as pl
from jax.experimental.pallas import tpu as pltpu


NEG_SLOPE = 0.01          # F.leaky_relu default

D_IN   = 43               # input features
H      = 200              # trunk width
HP     = 256              # padded trunk width
C12    = 100              # branch1/2 hidden
C12P   = 128
C3     = 500              # branch3 first hidden
C3P    = 512
BR_W   = 2 * C12P + C3P   # 768: fused branch first-layer output width
B3H2   = 300
B3H2P  = 384
N3     = 5                # branch3 output
NH12   = 4                # fused branch1/2 head logits (2 + 2)
OUT_W  = 128              # lane-dense packed output width (cols 0:9 are real)

TILE_B_DEFAULT = 256      # batch tile; small enough for v7x's 64 MiB VMEM


def _leaky_relu(x):
    return jnp.where(x >= 0, x, NEG_SLOPE * x)


def _softmax_last(x):
    m = jnp.max(x, axis=-1, keepdims=True)
    e = jnp.exp(x - m)
    return e * pl.reciprocal(jnp.sum(e, axis=-1, keepdims=True), approx=True)


def mlp_kernel(
    x_ref,
    w1_ref, b1_ref,          # layer1   [43, 256] bf16, [1, 256] f32
    w3_ref, b3_ref,          # layer3   [256, 256] bf16, [1, 256] f32
    wbr_ref, bbr_ref,        # fused branch*_1   [256, 768] bf16, [1, 768] f32
    wh12_ref, bh12_ref,      # block-diag branch1_2|branch2_2  [256, 4] bf16, [1, 4] f32
    w32_ref, b32_ref,        # branch3_2 [512, 384] bf16, [1, 384] f32
    w34f_ref, b34f_ref,      # folded branch3_3@branch3_4 [384, 5] bf16, [1, 5] f32
    out_ref,                 # packed (TILE_B, 128) f32
):
    bf16 = jnp.bfloat16
    x = x_ref[...].astype(bf16)

    # Shared trunk (bf16 MXU inputs, f32 accumulate, f32 VPU elementwise).
    h = _leaky_relu(
        jnp.dot(x, w1_ref[...], preferred_element_type=jnp.float32) + b1_ref[...])
    h = _leaky_relu(
        jnp.dot(h.astype(bf16), w3_ref[...], preferred_element_type=jnp.float32)
        + b3_ref[...])

    # Fused first layer of all three branches: one wide MXU matmul.
    a = _leaky_relu(
        jnp.dot(h.astype(bf16), wbr_ref[...], preferred_element_type=jnp.float32)
        + bbr_ref[...])
    a12 = a[:, : 2 * C12P].astype(bf16)     # branch1 | branch2 activations (padded)
    a3  = a[:, 2 * C12P:].astype(bf16)      # branch3 activations (padded)

    # Branches 1 & 2 heads: block-diagonal fused matmul -> (TB, 4) logits.
    logits12 = (jnp.dot(a12, wh12_ref[...], preferred_element_type=jnp.float32)
                + bh12_ref[...])
    o1 = _softmax_last(logits12[:, 0:2])
    o2 = _softmax_last(logits12[:, 2:4])

    # Branch 3 tail.  branch3_3 and branch3_4 have no activation between them, so
    # their weights were folded on the host into a single [384, 5] matrix.  No
    # activation/softmax on the final output (matches PyTorch).
    h3 = _leaky_relu(
        jnp.dot(a3, w32_ref[...], preferred_element_type=jnp.float32) + b32_ref[...])
    o3 = (jnp.dot(h3.astype(bf16), w34f_ref[...], preferred_element_type=jnp.float32)
          + b34f_ref[...])

    # Single lane-dense packed output slab: [o1 | o2 | o3 | zeros] -> (TB, 128).
    pad = jnp.zeros((o1.shape[0], OUT_W - (2 + 2 + N3)), jnp.float32)
    out_ref[...] = jnp.concatenate([o1, o2, o3, pad], axis=-1)


# -----------------------------------------------------------------------------
# Parameter construction / packing (host side)
# -----------------------------------------------------------------------------
_LAYER_DIMS = {
    "layer1":    (43, 200),
    "layer3":    (200, 200),
    "branch1_1": (200, 100),
    "branch1_2": (100, 2),
    "branch2_1": (200, 100),
    "branch2_2": (100, 2),
    "branch3_1": (200, 500),
    "branch3_2": (500, 300),
    "branch3_3": (300, 200),
    "branch3_4": (200, 5),
}


def init_params(key):
    """Torch-style init: weights [in, out] (transposed vs nn.Linear), biases [out]."""
    params = {}
    for name, (din, dout) in _LAYER_DIMS.items():
        key, kw, kb = jax.random.split(key, 3)
        bound = 1.0 / jnp.sqrt(din)
        w = jax.random.uniform(kw, (din, dout), jnp.float32, -bound, bound)
        b = jax.random.uniform(kb, (dout,), jnp.float32, -bound, bound)
        params[name] = (w, b)
    return params


def _place(shape, pieces):
    """Zero array of `shape` with (row_off, col_off, block) pieces written in."""
    out = jnp.zeros(shape, jnp.float32)
    for r0, c0, a in pieces:
        out = out.at[r0:r0 + a.shape[0], c0:c0 + a.shape[1]].set(a)
    return out


def pack_params(params):
    """Pad / fuse / fold raw f32 params into the bf16 kernel operand layout."""
    bf, f32 = jnp.bfloat16, jnp.float32
    w = lambda n: params[n][0]
    b = lambda n: params[n][1][None, :]

    w1p = _place((D_IN, HP), [(0, 0, w("layer1"))]).astype(bf)
    b1p = _place((1, HP), [(0, 0, b("layer1"))]).astype(f32)
    w3p = _place((HP, HP), [(0, 0, w("layer3"))]).astype(bf)
    b3p = _place((1, HP), [(0, 0, b("layer3"))]).astype(f32)

    # Fused branch first layers: cols [0:100]=b1_1, [128:228]=b2_1, [256:756]=b3_1.
    wbr = _place((HP, BR_W), [(0, 0, w("branch1_1")),
                              (0, C12P, w("branch2_1")),
                              (0, 2 * C12P, w("branch3_1"))]).astype(bf)
    bbr = _place((1, BR_W), [(0, 0, b("branch1_1")),
                             (0, C12P, b("branch2_1")),
                             (0, 2 * C12P, b("branch3_1"))]).astype(f32)

    # Block-diagonal fused heads: rows 0:100 -> cols 0:2, rows 128:228 -> cols 2:4.
    wh12 = _place((2 * C12P, NH12), [(0, 0, w("branch1_2")),
                                     (C12P, 2, w("branch2_2"))]).astype(bf)
    bh12 = _place((1, NH12), [(0, 0, b("branch1_2")),
                              (0, 2, b("branch2_2"))]).astype(f32)

    w32p = _place((C3P, B3H2P), [(0, 0, w("branch3_2"))]).astype(bf)
    b32p = _place((1, B3H2P), [(0, 0, b("branch3_2"))]).astype(f32)

    # Fold branch3_3 @ branch3_4 (no nonlinearity between them in eval mode):
    #   W_fold = W33 @ W34  ([300,200]@[200,5] -> [300,5])
    #   b_fold = b33 @ W34 + b34
    w_fold = w("branch3_3") @ w("branch3_4")                      # f32 fold on host
    b_fold = b("branch3_3") @ w("branch3_4") + b("branch3_4")
    w34f = _place((B3H2P, N3), [(0, 0, w_fold)]).astype(bf)
    b34f = b_fold.astype(f32)

    return (w1p, b1p, w3p, b3p, wbr, bbr, wh12, bh12,
            w32p, b32p, w34f, b34f)


# -----------------------------------------------------------------------------
# Wrapper
# -----------------------------------------------------------------------------
def _round_up(x, m):
    return ((x + m - 1) // m) * m


def mlp_forward(x, packed, tile_b=None):
    """x: [B, 43] f32. Returns (out1 [B,2], out2 [B,2], out3 [B,5])."""
    B = x.shape[0]
    if tile_b is None:
        tile_b = min(TILE_B_DEFAULT, _round_up(B, 8))
    Bp = _round_up(B, tile_b)
    if Bp != B:
        x = jnp.pad(x, ((0, Bp - B), (0, 0)))
    grid = (Bp // tile_b,)

    x_spec = pl.BlockSpec((tile_b, D_IN), lambda i: (i, 0))
    # Weights/biases: constant index_map -> VMEM-resident across batch tiles.
    w_specs = [pl.BlockSpec(p.shape, lambda i: (0, 0)) for p in packed]
    out_spec = pl.BlockSpec((tile_b, OUT_W), lambda i: (i, 0))

    out = pl.pallas_call(
        mlp_kernel,
        out_shape=jax.ShapeDtypeStruct((Bp, OUT_W), jnp.float32),
        grid=grid,
        in_specs=[x_spec] + w_specs,
        out_specs=out_spec,
        compiler_params=pltpu.CompilerParams(
            dimension_semantics=("parallel",)),
    )(x, *packed)

    return out[:B, 0:2], out[:B, 2:4], out[:B, 4:4 + N3]


# -----------------------------------------------------------------------------
# Pure-JAX f32 reference (mirrors the PyTorch eval-mode forward)
# -----------------------------------------------------------------------------
def mlp_reference(x, params):
    def lin(h, name):
        w, b = params[name]
        return h @ w + b
    h = _leaky_relu(lin(x, "layer1"))
    h = _leaky_relu(lin(h, "layer3"))
    o1 = jax.nn.softmax(lin(_leaky_relu(lin(h, "branch1_1")), "branch1_2"), axis=-1)
    o2 = jax.nn.softmax(lin(_leaky_relu(lin(h, "branch2_1")), "branch2_2"), axis=-1)
    o3 = _leaky_relu(lin(h, "branch3_1"))
    o3 = _leaky_relu(lin(o3, "branch3_2"))
    o3 = lin(o3, "branch3_3")
    o3 = lin(o3, "branch3_4")
    return o1, o2, o3


if __name__ == "__main__":
    key = jax.random.PRNGKey(0)
    kx, kp = jax.random.split(key)

    B = 8
    x = jax.random.normal(kx, (B, D_IN), jnp.float32)
    params = init_params(kp)
    packed = pack_params(params)

    out1, out2, out3 = mlp_forward(x, packed)
    jax.block_until_ready((out1, out2, out3))

    assert out1.shape == (B, 2)
    assert out2.shape == (B, 2)
    assert out3.shape == (B, N3)
    # softmax rows should sum to ~1 (approx-reciprocal denominator)
    assert jnp.allclose(jnp.sum(out1, axis=-1), 1.0, atol=1e-2)
    assert jnp.allclose(jnp.sum(out2, axis=-1), 1.0, atol=1e-2)

    # compare against f32 reference (loose tolerance: weights run in bf16)
    r1, r2, r3 = mlp_reference(x, params)
    assert jnp.allclose(out1, r1, atol=3e-2, rtol=3e-2)
    assert jnp.allclose(out2, r2, atol=3e-2, rtol=3e-2)
    assert jnp.allclose(out3, r3, atol=3e-2, rtol=3e-2)

    print("KERNEL_OK")
</pallas_src>

<mosaic_0001>
module attributes {stable_mosaic.version = 11 : i64} {
  func.func @mlp_kernel(%arg0: i32, %arg1: memref<8x43xf32, #tpu.memory_space<vmem>>, %arg2: memref<43x256xbf16, #tpu.memory_space<vmem>>, %arg3: memref<1x256xf32, #tpu.memory_space<vmem>>, %arg4: memref<256x256xbf16, #tpu.memory_space<vmem>>, %arg5: memref<1x256xf32, #tpu.memory_space<vmem>>, %arg6: memref<256x768xbf16, #tpu.memory_space<vmem>>, %arg7: memref<1x768xf32, #tpu.memory_space<vmem>>, %arg8: memref<256x4xbf16, #tpu.memory_space<vmem>>, %arg9: memref<1x4xf32, #tpu.memory_space<vmem>>, %arg10: memref<512x384xbf16, #tpu.memory_space<vmem>>, %arg11: memref<1x384xf32, #tpu.memory_space<vmem>>, %arg12: memref<384x5xbf16, #tpu.memory_space<vmem>>, %arg13: memref<1x5xf32, #tpu.memory_space<vmem>>, %arg14: memref<8x128xf32, #tpu.memory_space<vmem>>) attributes {dimension_semantics = [#tpu.dimension_semantics<parallel>], iteration_bounds = array<i64: 1>, scalar_prefetch = 0 : i64, scratch_operands = 0 : i64, tpu.core_type = #tpu.core_type<tc>, window_params = [{transform_indices = @transform_0, window_bounds = array<i64: 8, 43>}, {pipeline_mode = #tpu.pipeline_mode<synchronous>, transform_indices = @transform_1, window_bounds = array<i64: 43, 256>}, {pipeline_mode = #tpu.pipeline_mode<synchronous>, transform_indices = @transform_2, window_bounds = array<i64: 1, 256>}, {pipeline_mode = #tpu.pipeline_mode<synchronous>, transform_indices = @transform_3, window_bounds = array<i64: 256, 256>}, {pipeline_mode = #tpu.pipeline_mode<synchronous>, transform_indices = @transform_4, window_bounds = array<i64: 1, 256>}, {pipeline_mode = #tpu.pipeline_mode<synchronous>, transform_indices = @transform_5, window_bounds = array<i64: 256, 768>}, {pipeline_mode = #tpu.pipeline_mode<synchronous>, transform_indices = @transform_6, window_bounds = array<i64: 1, 768>}, {pipeline_mode = #tpu.pipeline_mode<synchronous>, transform_indices = @transform_7, window_bounds = array<i64: 256, 4>}, {pipeline_mode = #tpu.pipeline_mode<synchronous>, transform_indices = @transform_8, window_bounds = array<i64: 1, 4>}, {pipeline_mode = #tpu.pipeline_mode<synchronous>, transform_indices = @transform_9, window_bounds = array<i64: 512, 384>}, {pipeline_mode = #tpu.pipeline_mode<synchronous>, transform_indices = @transform_10, window_bounds = array<i64: 1, 384>}, {pipeline_mode = #tpu.pipeline_mode<synchronous>, transform_indices = @transform_11, window_bounds = array<i64: 384, 5>}, {pipeline_mode = #tpu.pipeline_mode<synchronous>, transform_indices = @transform_12, window_bounds = array<i64: 1, 5>}, {transform_indices = @transform_13, window_bounds = array<i64: 8, 128>}]} {
    %c0 = arith.constant 0 : index
    %c0_0 = arith.constant 0 : index
    %0 = vector.load %arg1[%c0, %c0_0] : memref<8x43xf32, #tpu.memory_space<vmem>>, vector<8x43xf32>
    %1 = arith.truncf %0 : vector<8x43xf32> to vector<8x43xbf16>
    %c0_1 = arith.constant 0 : index
    %c0_2 = arith.constant 0 : index
    %2 = vector.load %arg2[%c0_1, %c0_2] : memref<43x256xbf16, #tpu.memory_space<vmem>>, vector<43x256xbf16>
    %cst = arith.constant dense<0.000000e+00> : vector<8x256xf32>
    %3 = tpu.matmul %1, %2, %cst {dimension_numbers = #tpu.dot_dimension_numbers<[1], [0], [0], [1], [0, 0, 1, 1], [], []>} : vector<8x43xbf16>, vector<43x256xbf16>, vector<8x256xf32> -> vector<8x256xf32>
    %c0_3 = arith.constant 0 : index
    %c0_4 = arith.constant 0 : index
    %4 = vector.load %arg3[%c0_3, %c0_4] : memref<1x256xf32, #tpu.memory_space<vmem>>, vector<1x256xf32>
    %5 = vector.broadcast %4 : vector<1x256xf32> to vector<8x256xf32>
    %6 = arith.addf %3, %5 : vector<8x256xf32>
    %cst_5 = arith.constant 0.000000e+00 : f32
    %7 = vector.broadcast %cst_5 : f32 to vector<8x256xf32>
    %8 = arith.cmpf oge, %6, %7 : vector<8x256xf32>
    %cst_6 = arith.constant 0.00999999977 : f32
    %9 = vector.broadcast %cst_6 : f32 to vector<8x256xf32>
    %10 = arith.mulf %9, %6 : vector<8x256xf32>
    %11 = arith.select %8, %6, %10 : vector<8x256xi1>, vector<8x256xf32>
    %12 = arith.truncf %11 : vector<8x256xf32> to vector<8x256xbf16>
    %c0_7 = arith.constant 0 : index
    %c0_8 = arith.constant 0 : index
    %13 = vector.load %arg4[%c0_7, %c0_8] : memref<256x256xbf16, #tpu.memory_space<vmem>>, vector<256x256xbf16>
    %cst_9 = arith.constant dense<0.000000e+00> : vector<8x256xf32>
    %14 = tpu.matmul %12, %13, %cst_9 {dimension_numbers = #tpu.dot_dimension_numbers<[1], [0], [0], [1], [0, 0, 1, 1], [], []>} : vector<8x256xbf16>, vector<256x256xbf16>, vector<8x256xf32> -> vector<8x256xf32>
    %c0_10 = arith.constant 0 : index
    %c0_11 = arith.constant 0 : index
    %15 = vector.load %arg5[%c0_10, %c0_11] : memref<1x256xf32, #tpu.memory_space<vmem>>, vector<1x256xf32>
    %16 = vector.broadcast %15 : vector<1x256xf32> to vector<8x256xf32>
    %17 = arith.addf %14, %16 : vector<8x256xf32>
    %cst_12 = arith.constant 0.000000e+00 : f32
    %18 = vector.broadcast %cst_12 : f32 to vector<8x256xf32>
    %19 = arith.cmpf oge, %17, %18 : vector<8x256xf32>
    %cst_13 = arith.constant 0.00999999977 : f32
    %20 = vector.broadcast %cst_13 : f32 to vector<8x256xf32>
    %21 = arith.mulf %20, %17 : vector<8x256xf32>
    %22 = arith.select %19, %17, %21 : vector<8x256xi1>, vector<8x256xf32>
    %23 = arith.truncf %22 : vector<8x256xf32> to vector<8x256xbf16>
    %c0_14 = arith.constant 0 : index
    %c0_15 = arith.constant 0 : index
    %24 = vector.load %arg6[%c0_14, %c0_15] : memref<256x768xbf16, #tpu.memory_space<vmem>>, vector<256x768xbf16>
    %cst_16 = arith.constant dense<0.000000e+00> : vector<8x768xf32>
    %25 = tpu.matmul %23, %24, %cst_16 {dimension_numbers = #tpu.dot_dimension_numbers<[1], [0], [0], [1], [0, 0, 1, 1], [], []>} : vector<8x256xbf16>, vector<256x768xbf16>, vector<8x768xf32> -> vector<8x768xf32>
    %c0_17 = arith.constant 0 : index
    %c0_18 = arith.constant 0 : index
    %26 = vector.load %arg7[%c0_17, %c0_18] : memref<1x768xf32, #tpu.memory_space<vmem>>, vector<1x768xf32>
    %27 = vector.broadcast %26 : vector<1x768xf32> to vector<8x768xf32>
    %28 = arith.addf %25, %27 : vector<8x768xf32>
    %cst_19 = arith.constant 0.000000e+00 : f32
    %29 = vector.broadcast %cst_19 : f32 to vector<8x768xf32>
    %30 = arith.cmpf oge, %28, %29 : vector<8x768xf32>
    %cst_20 = arith.constant 0.00999999977 : f32
    %31 = vector.broadcast %cst_20 : f32 to vector<8x768xf32>
    %32 = arith.mulf %31, %28 : vector<8x768xf32>
    %33 = arith.select %30, %28, %32 : vector<8x768xi1>, vector<8x768xf32>
    %34 = vector.extract_strided_slice %33 {offsets = [0, 0], sizes = [8, 256], strides = [1, 1]} : vector<8x768xf32> to vector<8x256xf32>
    %35 = arith.truncf %34 : vector<8x256xf32> to vector<8x256xbf16>
    %36 = vector.extract_strided_slice %33 {offsets = [0, 256], sizes = [8, 512], strides = [1, 1]} : vector<8x768xf32> to vector<8x512xf32>
    %37 = arith.truncf %36 : vector<8x512xf32> to vector<8x512xbf16>
    %c0_21 = arith.constant 0 : index
    %c0_22 = arith.constant 0 : index
    %38 = vector.load %arg8[%c0_21, %c0_22] : memref<256x4xbf16, #tpu.memory_space<vmem>>, vector<256x4xbf16>
    %cst_23 = arith.constant dense<0.000000e+00> : vector<8x4xf32>
    %39 = tpu.matmul %35, %38, %cst_23 {dimension_numbers = #tpu.dot_dimension_numbers<[1], [0], [0], [1], [0, 0, 1, 1], [], []>} : vector<8x256xbf16>, vector<256x4xbf16>, vector<8x4xf32> -> vector<8x4xf32>
    %c0_24 = arith.constant 0 : index
    %c0_25 = arith.constant 0 : index
    %40 = vector.load %arg9[%c0_24, %c0_25] : memref<1x4xf32, #tpu.memory_space<vmem>>, vector<1x4xf32>
    %41 = vector.broadcast %40 : vector<1x4xf32> to vector<8x4xf32>
    %42 = arith.addf %39, %41 : vector<8x4xf32>
    %43 = vector.extract_strided_slice %42 {offsets = [0, 0], sizes = [8, 2], strides = [1, 1]} : vector<8x4xf32> to vector<8x2xf32>
    %cst_26 = arith.constant dense<0xFF800000> : vector<8xf32>
    %44 = vector.multi_reduction <maximumf>, %43, %cst_26 [1] : vector<8x2xf32> to vector<8xf32>
    %45 = vector.shape_cast %44 : vector<8xf32> to vector<8x1xf32>
    %46 = vector.broadcast %45 : vector<8x1xf32> to vector<8x2xf32>
    %47 = arith.subf %43, %46 : vector<8x2xf32>
    %48 = math.exp %47 : vector<8x2xf32>
    %cst_27 = arith.constant dense<0.000000e+00> : vector<8xf32>
    %49 = vector.multi_reduction <add>, %48, %cst_27 [1] : vector<8x2xf32> to vector<8xf32>
    %50 = vector.shape_cast %49 : vector<8xf32> to vector<8x1xf32>
    %51 = tpu.reciprocal %50 {approx = true} : vector<8x1xf32> -> vector<8x1xf32>
    %52 = vector.broadcast %51 : vector<8x1xf32> to vector<8x2xf32>
    %53 = arith.mulf %48, %52 : vector<8x2xf32>
    %54 = vector.extract_strided_slice %42 {offsets = [0, 2], sizes = [8, 2], strides = [1, 1]} : vector<8x4xf32> to vector<8x2xf32>
    %cst_28 = arith.constant dense<0xFF800000> : vector<8xf32>
    %55 = vector.multi_reduction <maximumf>, %54, %cst_28 [1] : vector<8x2xf32> to vector<8xf32>
    %56 = vector.shape_cast %55 : vector<8xf32> to vector<8x1xf32>
    %57 = vector.broadcast %56 : vector<8x1xf32> to vector<8x2xf32>
    %58 = arith.subf %54, %57 : vector<8x2xf32>
    %59 = math.exp %58 : vector<8x2xf32>
    %cst_29 = arith.constant dense<0.000000e+00> : vector<8xf32>
    %60 = vector.multi_reduction <add>, %59, %cst_29 [1] : vector<8x2xf32> to vector<8xf32>
    %61 = vector.shape_cast %60 : vector<8xf32> to vector<8x1xf32>
    %62 = tpu.reciprocal %61 {approx = true} : vector<8x1xf32> -> vector<8x1xf32>
    %63 = vector.broadcast %62 : vector<8x1xf32> to vector<8x2xf32>
    %64 = arith.mulf %59, %63 : vector<8x2xf32>
    %c0_30 = arith.constant 0 : index
    %c0_31 = arith.constant 0 : index
    %65 = vector.load %arg10[%c0_30, %c0_31] : memref<512x384xbf16, #tpu.memory_space<vmem>>, vector<512x384xbf16>
    %cst_32 = arith.constant dense<0.000000e+00> : vector<8x384xf32>
    %66 = tpu.matmul %37, %65, %cst_32 {dimension_numbers = #tpu.dot_dimension_numbers<[1], [0], [0], [1], [0, 0, 1, 1], [], []>} : vector<8x512xbf16>, vector<512x384xbf16>, vector<8x384xf32> -> vector<8x384xf32>
    %c0_33 = arith.constant 0 : index
    %c0_34 = arith.constant 0 : index
    %67 = vector.load %arg11[%c0_33, %c0_34] : memref<1x384xf32, #tpu.memory_space<vmem>>, vector<1x384xf32>
    %68 = vector.broadcast %67 : vector<1x384xf32> to vector<8x384xf32>
    %69 = arith.addf %66, %68 : vector<8x384xf32>
    %cst_35 = arith.constant 0.000000e+00 : f32
    %70 = vector.broadcast %cst_35 : f32 to vector<8x384xf32>
    %71 = arith.cmpf oge, %69, %70 : vector<8x384xf32>
    %cst_36 = arith.constant 0.00999999977 : f32
    %72 = vector.broadcast %cst_36 : f32 to vector<8x384xf32>
    %73 = arith.mulf %72, %69 : vector<8x384xf32>
    %74 = arith.select %71, %69, %73 : vector<8x384xi1>, vector<8x384xf32>
    %75 = arith.truncf %74 : vector<8x384xf32> to vector<8x384xbf16>
    %c0_37 = arith.constant 0 : index
    %c0_38 = arith.constant 0 : index
    %76 = vector.load %arg12[%c0_37, %c0_38] : memref<384x5xbf16, #tpu.memory_space<vmem>>, vector<384x5xbf16>
    %cst_39 = arith.constant dense<0.000000e+00> : vector<8x5xf32>
    %77 = tpu.matmul %75, %76, %cst_39 {dimension_numbers = #tpu.dot_dimension_numbers<[1], [0], [0], [1], [0, 0, 1, 1], [], []>} : vector<8x384xbf16>, vector<384x5xbf16>, vector<8x5xf32> -> vector<8x5xf32>
    %c0_40 = arith.constant 0 : index
    %c0_41 = arith.constant 0 : index
    %78 = vector.load %arg13[%c0_40, %c0_41] : memref<1x5xf32, #tpu.memory_space<vmem>>, vector<1x5xf32>
    %79 = vector.broadcast %78 : vector<1x5xf32> to vector<8x5xf32>
    %80 = arith.addf %77, %79 : vector<8x5xf32>
    %cst_42 = arith.constant 0.000000e+00 : f32
    %81 = vector.broadcast %cst_42 : f32 to vector<8x119xf32>
    %82 = tpu.concatenate %53, %64, %80, %81 in 1 : vector<8x2xf32>, vector<8x2xf32>, vector<8x5xf32>, vector<8x119xf32> -> vector<8x128xf32>
    %c0_43 = arith.constant 0 : index
    %c0_44 = arith.constant 0 : index
    %83 = vector.load %arg14[%c0_43, %c0_44] : memref<8x128xf32, #tpu.memory_space<vmem>>, vector<8x128xf32>
    tpu.vector_store %arg14[%c0_43, %c0_44], %82 {strides = array<i32>} : memref<8x128xf32, #tpu.memory_space<vmem>>, vector<8x128xf32>,
    return
  }
  func.func @transform_0(%arg0: i32) -> (i32, i32) {
    %c0_i32 = arith.constant 0 : i32
    %c0_i32_0 = arith.constant 0 : i32
    return %arg0, %c0_i32 : i32, i32
  }
  func.func @transform_1(%arg0: i32) -> (i32, i32) {
    %c0_i32 = arith.constant 0 : i32
    %c0_i32_0 = arith.constant 0 : i32
    %c0_i32_1 = arith.constant 0 : i32
    return %c0_i32, %c0_i32_0 : i32, i32
  }
  func.func @transform_2(%arg0: i32) -> (i32, i32) {
    %c0_i32 = arith.constant 0 : i32
    %c0_i32_0 = arith.constant 0 : i32
    %c0_i32_1 = arith.constant 0 : i32
    return %c0_i32, %c0_i32_0 : i32, i32
  }
  func.func @transform_3(%arg0: i32) -> (i32, i32) {
    %c0_i32 = arith.constant 0 : i32
    %c0_i32_0 = arith.constant 0 : i32
    %c0_i32_1 = arith.constant 0 : i32
    return %c0_i32, %c0_i32_0 : i32, i32
  }
  func.func @transform_4(%arg0: i32) -> (i32, i32) {
    %c0_i32 = arith.constant 0 : i32
    %c0_i32_0 = arith.constant 0 : i32
    %c0_i32_1 = arith.constant 0 : i32
    return %c0_i32, %c0_i32_0 : i32, i32
  }
  func.func @transform_5(%arg0: i32) -> (i32, i32) {
    %c0_i32 = arith.constant 0 : i32
    %c0_i32_0 = arith.constant 0 : i32
    %c0_i32_1 = arith.constant 0 : i32
    return %c0_i32, %c0_i32_0 : i32, i32
  }
  func.func @transform_6(%arg0: i32) -> (i32, i32) {
    %c0_i32 = arith.constant 0 : i32
    %c0_i32_0 = arith.constant 0 : i32
    %c0_i32_1 = arith.constant 0 : i32
    return %c0_i32, %c0_i32_0 : i32, i32
  }
  func.func @transform_7(%arg0: i32) -> (i32, i32) {
    %c0_i32 = arith.constant 0 : i32
    %c0_i32_0 = arith.constant 0 : i32
    %c0_i32_1 = arith.constant 0 : i32
    return %c0_i32, %c0_i32_0 : i32, i32
  }
  func.func @transform_8(%arg0: i32) -> (i32, i32) {
    %c0_i32 = arith.constant 0 : i32
    %c0_i32_0 = arith.constant 0 : i32
    %c0_i32_1 = arith.constant 0 : i32
    return %c0_i32, %c0_i32_0 : i32, i32
  }
  func.func @transform_9(%arg0: i32) -> (i32, i32) {
    %c0_i32 = arith.constant 0 : i32
    %c0_i32_0 = arith.constant 0 : i32
    %c0_i32_1 = arith.constant 0 : i32
    return %c0_i32, %c0_i32_0 : i32, i32
  }
  func.func @transform_10(%arg0: i32) -> (i32, i32) {
    %c0_i32 = arith.constant 0 : i32
    %c0_i32_0 = arith.constant 0 : i32
    %c0_i32_1 = arith.constant 0 : i32
    return %c0_i32, %c0_i32_0 : i32, i32
  }
  func.func @transform_11(%arg0: i32) -> (i32, i32) {
    %c0_i32 = arith.constant 0 : i32
    %c0_i32_0 = arith.constant 0 : i32
    %c0_i32_1 = arith.constant 0 : i32
    return %c0_i32, %c0_i32_0 : i32, i32
  }
  func.func @transform_12(%arg0: i32) -> (i32, i32) {
    %c0_i32 = arith.constant 0 : i32
    %c0_i32_0 = arith.constant 0 : i32
    %c0_i32_1 = arith.constant 0 : i32
    return %c0_i32, %c0_i32_0 : i32, i32
  }
  func.func @transform_13(%arg0: i32) -> (i32, i32) {
    %c0_i32 = arith.constant 0 : i32
    %c0_i32_0 = arith.constant 0 : i32
    return %arg0, %c0_i32 : i32, i32
  }
}

</mosaic_0001>

<llo_original>
// kernel: tpu_custom_call.1
$region0: #{tpu_custom_call.1}
  #allocation0 [shape = 'u32[]', space=smem, size = 0x4, offset = 0x4, fixed_abs, tag = 'smem constant byte address 0x4 - core index']
  #allocation1 [shape = 'u32[72,128]{1,0:T(1,128)}', space=vmem, size = 0x9000, scoped, tag = 'internal scratch']
  %s0 = inlined_call_operand.vmem [shape: f32[8,43], index: 0, kind: input, shape index: {}]
  %s1 = inlined_call_operand.vmem [shape: bf16[43,256], index: 1, kind: input, shape index: {}]
  %s2 = inlined_call_operand.vmem [shape: f32[1,256], index: 2, kind: input, shape index: {}]
  %s3 = inlined_call_operand.vmem [shape: bf16[256,256], index: 3, kind: input, shape index: {}]
  %s4 = inlined_call_operand.vmem [shape: f32[1,256], index: 4, kind: input, shape index: {}]
  %s5 = inlined_call_operand.hbm [shape: bf16[256,768], index: 5, kind: input, shape index: {}]
  %s6 = inlined_call_operand.vmem [shape: f32[1,768], index: 6, kind: input, shape index: {}]
  %s7 = inlined_call_operand.vmem [shape: bf16[256,4], index: 7, kind: input, shape index: {}]
  %s8 = inlined_call_operand.vmem [shape: f32[1,4], index: 8, kind: input, shape index: {}]
  %s9 = inlined_call_operand.hbm [shape: bf16[512,384], index: 9, kind: input, shape index: {}]
  %s10 = inlined_call_operand.vmem [shape: f32[1,384], index: 10, kind: input, shape index: {}]
  %s11 = inlined_call_operand.vmem [shape: bf16[384,5], index: 11, kind: input, shape index: {}]
  %s12 = inlined_call_operand.vmem [shape: f32[1,5], index: 12, kind: input, shape index: {}]
  %s13 = inlined_call_operand.hbm [shape: f32[8,128], index: 13, kind: output, shape index: {}]
  %s14 = sld [smem:[#allocation0]]
  $region70: #{tpu_custom_call.1} parent=0
    _
  %s16 = ssub.s32 1, %s14
  %s17 = scalar_select 0, %s16, %s14
  $region1: #{tpu_custom_call.1} parent=0
    #allocation2 [shape = 'u8[393216]{0}', space=vmem, size = 0x60000, scoped, tag = 'input window, operand 5, single buffered']
    #allocation3 [shape = 's32[1]{0}', space=sflag, size = 0x4, scoped, tag = 'scoped memory for tpu_custom_call.1']
    #allocation4 [shape = 's32[1]{0}', space=sflag, size = 0x4, scoped, tag = 'scoped memory for tpu_custom_call.1']
    #allocation5 [shape = 'u8[393216]{0}', space=vmem, size = 0x60000, scoped, tag = 'input window, operand 9, single buffered']
    #allocation6 [shape = 's32[1]{0}', space=sflag, size = 0x4, scoped, tag = 'scoped memory for tpu_custom_call.1']
    #allocation7 [shape = 'u8[4096]{0}', space=vmem, size = 0x1000, scoped, tag = 'output window, operand 0, single buffered']
    %18 = vsyncpa [#allocation3], 0
    %19 = vsyncpa [#allocation6], 0
    %20 = vsyncpa [#allocation4], 0
    // Predicated region
    $region2: #{tpu_custom_call.1} parent=1 // pred_check
      _
    $region3: #{tpu_custom_call.1} parent=1 // pred_check_branch
      %22 = sbr.rel (0) target = $region5
    $region4: #{tpu_custom_call.1} parent=1 // pred_region
      _
    $region5: #{tpu_custom_call.1} parent=1 // pred_fallthru
      _
    // Predicated region
    $region6: #{tpu_custom_call.1} parent=1 // pred_check
      _
    $region7: #{tpu_custom_call.1} parent=1 // pred_check_branch
      %24 = sbr.rel (0) target = $region9
    $region8: #{tpu_custom_call.1} parent=1 // pred_region
      _
    $region9: #{tpu_custom_call.1} parent=1 // pred_fallthru
      _
    // Predicated region
    $region10: #{tpu_custom_call.1} parent=1 // pred_check
      _
    $region11: #{tpu_custom_call.1} parent=1 // pred_check_branch
      %26 = sbr.rel (0) target = $region13
    $region12: #{tpu_custom_call.1} parent=1 // pred_region
      _
    $region13: #{tpu_custom_call.1} parent=1 // pred_fallthru
      _
    // Predicated region
    $region14: #{tpu_custom_call.1} parent=1 // pred_check
      _
    $region15: #{tpu_custom_call.1} parent=1 // pred_check_branch
      %28 = sbr.rel (0) target = $region17
    $region16: #{tpu_custom_call.1} parent=1 // pred_region
      _
    $region17: #{tpu_custom_call.1} parent=1 // pred_fallthru
      _
    // Predicated region
    $region18: #{tpu_custom_call.1} parent=1 // pred_check
      _
    $region19: #{tpu_custom_call.1} parent=1 // pred_check_branch
      %30 = sbr.rel (0) target = $region21
    $region20: #{tpu_custom_call.1} parent=1 // pred_region
      _
    $region21: #{tpu_custom_call.1} parent=1 // pred_fallthru
      _
    // Predicated region
    $region22: #{tpu_custom_call.1} parent=1 // pred_check
      _
    $region23: #{tpu_custom_call.1} parent=1 // pred_check_branch
      %32 = sbr.rel (0) target = $region25
    $region24: #{tpu_custom_call.1} parent=1 // pred_region
      %34 = vsyncadd [#allocation3], 0
      %s35 = sshll.u32 %s5, 4
      %s36 = int_to_ptr.hbm [resolvable:$true] %s35
      %s37 = sshll.u32 [#allocation2], 4
      %s38 = int_to_ptr.vmem [resolvable:$true] %s37
      %43 = dma.hbm_to_vmem [thread:$0]  %s36, 12288, %s38, [#allocation3], 384, 384, 24
    $region25: #{tpu_custom_call.1} parent=1 // pred_fallthru
      _
    // Predicated region
    $region26: #{tpu_custom_call.1} parent=1 // pred_check
      _
    $region27: #{tpu_custom_call.1} parent=1 // pred_check_branch
      %45 = sbr.rel (0) target = $region29
    $region28: #{tpu_custom_call.1} parent=1 // pred_region
      _
    $region29: #{tpu_custom_call.1} parent=1 // pred_fallthru
      _
    // Predicated region
    $region30: #{tpu_custom_call.1} parent=1 // pred_check
      _
    $region31: #{tpu_custom_call.1} parent=1 // pred_check_branch
      %47 = sbr.rel (0) target = $region33
    $region32: #{tpu_custom_call.1} parent=1 // pred_region
      _
    $region33: #{tpu_custom_call.1} parent=1 // pred_fallthru
      _
    // Predicated region
    $region34: #{tpu_custom_call.1} parent=1 // pred_check
      _
    $region35: #{tpu_custom_call.1} parent=1 // pred_check_branch
      %49 = sbr.rel (0) target = $region37
    $region36: #{tpu_custom_call.1} parent=1 // pred_region
      _
    $region37: #{tpu_custom_call.1} parent=1 // pred_fallthru
      _
    // Predicated region
    $region38: #{tpu_custom_call.1} parent=1 // pred_check
      _
    $region39: #{tpu_custom_call.1} parent=1 // pred_check_branch
      %51 = sbr.rel (0) target = $region41
    $region40: #{tpu_custom_call.1} parent=1 // pred_region
      %53 = vsyncadd [#allocation6], 0
      %s54 = sshll.u32 %s9, 4
      %s55 = int_to_ptr.hbm [resolvable:$true] %s54
      %s56 = sshll.u32 [#allocation5], 4
      %s57 = int_to_ptr.vmem [resolvable:$true] %s56
      %62 = dma.hbm_to_vmem [thread:$0]  %s55, 12288, %s57, [#allocation6], 192, 192, 12
    $region41: #{tpu_custom_call.1} parent=1 // pred_fallthru
      _
    // Predicated region
    $region42: #{tpu_custom_call.1} parent=1 // pred_check
      _
    $region43: #{tpu_custom_call.1} parent=1 // pred_check_branch
      %64 = sbr.rel (0) target = $region45
    $region44: #{tpu_custom_call.1} parent=1 // pred_region
      _
    $region45: #{tpu_custom_call.1} parent=1 // pred_fallthru
      _
    // Predicated region
    $region46: #{tpu_custom_call.1} parent=1 // pred_check
      _
    $region47: #{tpu_custom_call.1} parent=1 // pred_check_branch
      %66 = sbr.rel (0) target = $region49
    $region48: #{tpu_custom_call.1} parent=1 // pred_region
      _
    $region49: #{tpu_custom_call.1} parent=1 // pred_fallthru
      _
    // Predicated region
    $region50: #{tpu_custom_call.1} parent=1 // pred_check
      _
    $region51: #{tpu_custom_call.1} parent=1 // pred_check_branch
      %68 = sbr.rel (0) target = $region53
    $region52: #{tpu_custom_call.1} parent=1 // pred_region
      _
    $region53: #{tpu_custom_call.1} parent=1 // pred_fallthru
      _
    // Predicated region
    $region54: #{tpu_custom_call.1} parent=1 // pred_check
      _
    $region55: #{tpu_custom_call.1} parent=1 // pred_check_branch
      %70 = sbr.rel (0) target = $region57
    $region56: #{tpu_custom_call.1} parent=1 // pred_region
      %72 = dma.done [#allocation3], 12288
    $region57: #{tpu_custom_call.1} parent=1 // pred_fallthru
      _
    // Predicated region
    $region58: #{tpu_custom_call.1} parent=1 // pred_check
      _
    $region59: #{tpu_custom_call.1} parent=1 // pred_check_branch
      %74 = sbr.rel (0) target = $region61
    $region60: #{tpu_custom_call.1} parent=1 // pred_region
      %76 = dma.done [#allocation6], 12288
    $region61: #{tpu_custom_call.1} parent=1 // pred_fallthru
      _
    %v78 = vld [vmem:[%s0] sm:$0xff]
    %v79 = vpack.c.bf16 %v78, %v78
    %v80 = vld [vmem:[%s1] sm:$0xff]
    %v81 = vld [vmem:[%s1 + $0x8] sm:$0xff]
    %v82 = vld [vmem:[%s1 + $0x10] sm:$0xff]
    %v83 = vld [vmem:[%s1 + $0x18] sm:$0xff]
    %v84 = vld [vmem:[%s1 + $0x20] sm:$0xff]
    %v85 = vld [vmem:[%s1 + $0x28] sm:$0x33]
    %v86 = vld [vmem:[%s2] sm:$0x3]
    %v88 = vperm.slane %v86, 0
    %v89 = vperm.slane %v86, 1
    %v98 = vunpack.c.l.b16 %v80
    %v99 = vunpack.c.h.b16 %v80
    %v100 = vunpack.c.l.b16 %v81
    %v101 = vunpack.c.h.b16 %v81
    %v102 = vunpack.c.l.b16 %v82
    %v103 = vunpack.c.h.b16 %v82
    %v104 = vunpack.c.l.b16 %v83
    %v105 = vunpack.c.h.b16 %v83
    %v106 = vunpack.c.l.b16 %v84
    %v107 = vunpack.c.h.b16 %v84
    %v108 = vunpack.c.l.b16 %v85
    %v109 = vunpack.c.h.b16 %v85
    %v110 = vpack.c.b16 %v100, %v98
    %v111 = vpack.c.b16 %v101, %v99
    %v112 = vpack.c.b16 %v104, %v102
    %v113 = vpack.c.b16 %v105, %v103
    %v114 = vpack.c.b16 %v108, %v106
    %v115 = vpack.c.b16 %v109, %v107
    %vm120 = vcmask 351232
    %v122 = vsel %vm120, %v79, 0
    %vm124 = vcmask 1044480
    %vm125 = vcmask 1045504
    %v126 = vsel %vm124, 4294967295, 65535
    %v127 = vsel %vm125, %v126, 0
    %v129 = vand.u32 %v114, %v127
    %v132 = vand.u32 %v115, %v127
    %134 = vmatpush.bf16.msra.mxu0 0
    %135 = vmatpush.bf16.msra.mxu0 0
    %136 = vmatpush.bf16.msra.mxu0 0
    %137 = vmatpush.bf16.msra.mxu0 0
    %138 = vmatpush.bf16.msra.mxu0 0
    %139 = vmatpush.bf16.msra.mxu0 %v129
    %140 = vmatpush.bf16.msra.mxu0 %v112
    %141 = vmatpush.bf16.msra.mxu0 %v110
    %142 = vmatmul.bf16.gmra.mxu0 %v122
    %v143 = vpop.f32.mrf.mxu0
    %v144 = vadd.f32 %v88, %v143
    %v145 = vpop.f32.mrf.mxu0
    %146 = vdwg.mxu0
    %147 = vmatpush.bf16.msra.mxu0 0
    %148 = vmatpush.bf16.msra.mxu0 0
    %149 = vmatpush.bf16.msra.mxu0 0
    %150 = vmatpush.bf16.msra.mxu0 0
    %151 = vmatpush.bf16.msra.mxu0 0
    %152 = vmatpush.bf16.msra.mxu0 %v132
    %153 = vmatpush.bf16.msra.mxu0 %v113
    %154 = vmatpush.bf16.msra.mxu0 %v111
    %155 = vmatmul.bf16.gmra.mxu0 %v122
    %v156 = vpop.f32.mrf.mxu0
    %v157 = vadd.f32 %v89, %v156
    %v158 = vpop.f32.mrf.mxu0
    %159 = vdwg.mxu0
    %vm160 = vcmp.ge.f32.partialorder %v144, 0.0
    %vm161 = vcmp.ge.f32.partialorder %v157, 0.0
    %v162 = vmul.f32 %v144, 0.01
    %v163 = vmul.f32 %v157, 0.01
    %v164 = vsel %vm160, %v144, %v162
    %v165 = vsel %vm161, %v157, %v163
    %v166 = vpack.c.bf16 %v164, %v164
    %v167 = vpack.c.bf16 %v165, %v165
    %v168 = vld [vmem:[%s3] sm:$0xff]
    %v169 = vld [vmem:[%s3 + $0x8] sm:$0xff]
    %v170 = vld [vmem:[%s3 + $0x10] sm:$0xff]
    %v171 = vld [vmem:[%s3 + $0x18] sm:$0xff]
    %v172 = vld [vmem:[%s3 + $0x20] sm:$0xff]
    %v173 = vld [vmem:[%s3 + $0x28] sm:$0xff]
    %v174 = vld [vmem:[%s3 + $0x30] sm:$0xff]
    %v175 = vld [vmem:[%s3 + $0x38] sm:$0xff]
    %v176 = vld [vmem:[%s3 + $0x40] sm:$0xff]
    %v177 = vld [vmem:[%s3 + $0x48] sm:$0xff]
    %v178 = vld [vmem:[%s3 + $0x50] sm:$0xff]
    %v179 = vld [vmem:[%s3 + $0x58] sm:$0xff]
    %v180 = vld [vmem:[%s3 + $0x60] sm:$0xff]
    %v181 = vld [vmem:[%s3 + $0x68] sm:$0xff]
    %v182 = vld [vmem:[%s3 + $0x70] sm:$0xff]
    %v183 = vld [vmem:[%s3 + $0x78] sm:$0xff]
    %v184 = vld [vmem:[%s3 + $0x80] sm:$0xff]
    %v185 = vld [vmem:[%s3 + $0x88] sm:$0xff]
    %v186 = vld [vmem:[%s3 + $0x90] sm:$0xff]
    %v187 = vld [vmem:[%s3 + $0x98] sm:$0xff]
    %v188 = vld [vmem:[%s3 + $0xa0] sm:$0xff]
    %v189 = vld [vmem:[%s3 + $0xa8] sm:$0xff]
    %v190 = vld [vmem:[%s3 + $0xb0] sm:$0xff]
    %v191 = vld [vmem:[%s3 + $0xb8] sm:$0xff]
    %v192 = vld [vmem:[%s3 + $0xc0] sm:$0xff]
    %v193 = vld [vmem:[%s3 + $0xc8] sm:$0xff]
    %v194 = vld [vmem:[%s3 + $0xd0] sm:$0xff]
    %v195 = vld [vmem:[%s3 + $0xd8] sm:$0xff]
    %v196 = vld [vmem:[%s3 + $0xe0] sm:$0xff]
    %v197 = vld [vmem:[%s3 + $0xe8] sm:$0xff]
    %v198 = vld [vmem:[%s3 + $0xf0] sm:$0xff]
    %v199 = vld [vmem:[%s3 + $0xf8] sm:$0xff]
    %v200 = vld [vmem:[%s4] sm:$0x3]
    %v202 = vperm.slane %v200, 0
    %v203 = vperm.slane %v200, 1
    %v238 = vunpack.c.l.b16 %v168
    %v239 = vunpack.c.h.b16 %v168
    %v240 = vunpack.c.l.b16 %v169
    %v241 = vunpack.c.h.b16 %v169
    %v242 = vunpack.c.l.b16 %v170
    %v243 = vunpack.c.h.b16 %v170
    %v244 = vunpack.c.l.b16 %v171
    %v245 = vunpack.c.h.b16 %v171
    %v246 = vunpack.c.l.b16 %v172
    %v247 = vunpack.c.h.b16 %v172
    %v248 = vunpack.c.l.b16 %v173
    %v249 = vunpack.c.h.b16 %v173
    %v250 = vunpack.c.l.b16 %v174
    %v251 = vunpack.c.h.b16 %v174
    %v252 = vunpack.c.l.b16 %v175
    %v253 = vunpack.c.h.b16 %v175
    %v254 = vunpack.c.l.b16 %v176
    %v255 = vunpack.c.h.b16 %v176
    %v256 = vunpack.c.l.b16 %v177
    %v257 = vunpack.c.h.b16 %v177
    %v258 = vunpack.c.l.b16 %v178
    %v259 = vunpack.c.h.b16 %v178
    %v260 = vunpack.c.l.b16 %v179
    %v261 = vunpack.c.h.b16 %v179
    %v262 = vunpack.c.l.b16 %v180
    %v263 = vunpack.c.h.b16 %v180
    %v264 = vunpack.c.l.b16 %v181
    %v265 = vunpack.c.h.b16 %v181
    %v266 = vunpack.c.l.b16 %v182
    %v267 = vunpack.c.h.b16 %v182
    %v268 = vunpack.c.l.b16 %v183
    %v269 = vunpack.c.h.b16 %v183
    %v270 = vunpack.c.l.b16 %v184
    %v271 = vunpack.c.h.b16 %v184
    %v272 = vunpack.c.l.b16 %v185
    %v273 = vunpack.c.h.b16 %v185
    %v274 = vunpack.c.l.b16 %v186
    %v275 = vunpack.c.h.b16 %v186
    %v276 = vunpack.c.l.b16 %v187
    %v277 = vunpack.c.h.b16 %v187
    %v278 = vunpack.c.l.b16 %v188
    %v279 = vunpack.c.h.b16 %v188
    %v280 = vunpack.c.l.b16 %v189
    %v281 = vunpack.c.h.b16 %v189
    %v282 = vunpack.c.l.b16 %v190
    %v283 = vunpack.c.h.b16 %v190
    %v284 = vunpack.c.l.b16 %v191
    %v285 = vunpack.c.h.b16 %v191
    %v286 = vunpack.c.l.b16 %v192
    %v287 = vunpack.c.h.b16 %v192
    %v288 = vunpack.c.l.b16 %v193
    %v289 = vunpack.c.h.b16 %v193
    %v290 = vunpack.c.l.b16 %v194
    %v291 = vunpack.c.h.b16 %v194
    %v292 = vunpack.c.l.b16 %v195
    %v293 = vunpack.c.h.b16 %v195
    %v294 = vunpack.c.l.b16 %v196
    %v295 = vunpack.c.h.b16 %v196
    %v296 = vunpack.c.l.b16 %v197
    %v297 = vunpack.c.h.b16 %v197
    %v298 = vunpack.c.l.b16 %v198
    %v299 = vunpack.c.h.b16 %v198
    %v300 = vunpack.c.l.b16 %v199
    %v301 = vunpack.c.h.b16 %v199
    %v302 = vpack.c.b16 %v240, %v238
    %v303 = vpack.c.b16 %v241, %v239
    %v304 = vpack.c.b16 %v244, %v242
    %v305 = vpack.c.b16 %v245, %v243
    %v306 = vpack.c.b16 %v248, %v246
    %v307 = vpack.c.b16 %v249, %v247
    %v308 = vpack.c.b16 %v252, %v250
    %v309 = vpack.c.b16 %v253, %v251
    %v310 = vpack.c.b16 %v256, %v254
    %v311 = vpack.c.b16 %v257, %v255
    %v312 = vpack.c.b16 %v260, %v258
    %v313 = vpack.c.b16 %v261, %v259
    %v314 = vpack.c.b16 %v264, %v262
    %v315 = vpack.c.b16 %v265, %v263
    %v316 = vpack.c.b16 %v268, %v266
    %v317 = vpack.c.b16 %v269, %v267
    %v318 = vpack.c.b16 %v272, %v270
    %v319 = vpack.c.b16 %v273, %v271
    %v320 = vpack.c.b16 %v276, %v274
    %v321 = vpack.c.b16 %v277, %v275
    %v322 = vpack.c.b16 %v280, %v278
    %v323 = vpack.c.b16 %v281, %v279
    %v324 = vpack.c.b16 %v284, %v282
    %v325 = vpack.c.b16 %v285, %v283
    %v326 = vpack.c.b16 %v288, %v286
    %v327 = vpack.c.b16 %v289, %v287
    %v328 = vpack.c.b16 %v292, %v290
    %v329 = vpack.c.b16 %v293, %v291
    %v330 = vpack.c.b16 %v296, %v294
    %v331 = vpack.c.b16 %v297, %v295
    %v332 = vpack.c.b16 %v300, %v298
    %v333 = vpack.c.b16 %v301, %v299
    %366 = vmatpush.bf16.msra.mxu0 %v316
    %367 = vmatpush.bf16.msra.mxu0 %v314
    %368 = vmatpush.bf16.msra.mxu0 %v312
    %369 = vmatpush.bf16.msra.mxu0 %v310
    %370 = vmatpush.bf16.msra.mxu0 %v308
    %371 = vmatpush.bf16.msra.mxu0 %v306
    %372 = vmatpush.bf16.msra.mxu0 %v304
    %373 = vmatpush.bf16.msra.mxu0 %v302
    %374 = vmatmul.bf16.gmra.mxu0 %v166
    %v375 = vpop.f32.mrf.mxu0
    %v376 = vadd.f32 %v202, %v375
    %v377 = vpop.f32.mrf.mxu0
    %378 = vdwg.mxu0
    %379 = vmatpush.bf16.msra.mxu0 %v332
    %380 = vmatpush.bf16.msra.mxu0 %v330
    %381 = vmatpush.bf16.msra.mxu0 %v328
    %382 = vmatpush.bf16.msra.mxu0 %v326
    %383 = vmatpush.bf16.msra.mxu0 %v324
    %384 = vmatpush.bf16.msra.mxu0 %v322
    %385 = vmatpush.bf16.msra.mxu0 %v320
    %386 = vmatpush.bf16.msra.mxu0 %v318
    %387 = vmatmul.bf16.gmra.mxu0 %v167
    %v388 = vpop.f32.mrf.mxu0
    %v389 = vadd.f32 %v376, %v388
    %v390 = vpop.f32.mrf.mxu0
    %391 = vdwg.mxu0
    %392 = vmatpush.bf16.msra.mxu0 %v317
    %393 = vmatpush.bf16.msra.mxu0 %v315
    %394 = vmatpush.bf16.msra.mxu0 %v313
    %395 = vmatpush.bf16.msra.mxu0 %v311
    %396 = vmatpush.bf16.msra.mxu0 %v309
    %397 = vmatpush.bf16.msra.mxu0 %v307
    %398 = vmatpush.bf16.msra.mxu0 %v305
    %399 = vmatpush.bf16.msra.mxu0 %v303
    %400 = vmatmul.bf16.gmra.mxu0 %v166
    %v401 = vpop.f32.mrf.mxu0
    %v402 = vadd.f32 %v203, %v401
    %v403 = vpop.f32.mrf.mxu0
    %404 = vdwg.mxu0
    %405 = vmatpush.bf16.msra.mxu0 %v333
    %406 = vmatpush.bf16.msra.mxu0 %v331
    %407 = vmatpush.bf16.msra.mxu0 %v329
    %408 = vmatpush.bf16.msra.mxu0 %v327
    %409 = vmatpush.bf16.msra.mxu0 %v325
    %410 = vmatpush.bf16.msra.mxu0 %v323
    %411 = vmatpush.bf16.msra.mxu0 %v321
    %412 = vmatpush.bf16.msra.mxu0 %v319
    %413 = vmatmul.bf16.gmra.mxu0 %v167
    %v414 = vpop.f32.mrf.mxu0
    %v415 = vadd.f32 %v402, %v414
    %v416 = vpop.f32.mrf.mxu0
    %417 = vdwg.mxu0
    %vm418 = vcmp.ge.f32.partialorder %v389, 0.0
    %vm419 = vcmp.ge.f32.partialorder %v415, 0.0
    %v420 = vmul.f32 %v389, 0.01
    %v421 = vmul.f32 %v415, 0.01
    %v422 = vsel %vm418, %v389, %v420
    %v423 = vsel %vm419, %v415, %v421
    %v424 = vpack.c.bf16 %v422, %v422
    %v425 = vpack.c.bf16 %v423, %v423
    %v426 = vld [vmem:[#allocation2] sm:$0xff]
    %v427 = vld [vmem:[#allocation2 + $0x8] sm:$0xff]
    %v428 = vld [vmem:[#allocation2 + $0x10] sm:$0xff]
    %v429 = vld [vmem:[#allocation2 + $0x18] sm:$0xff]
    %v430 = vld [vmem:[#allocation2 + $0x20] sm:$0xff]
    %v431 = vld [vmem:[#allocation2 + $0x28] sm:$0xff]
    %v432 = vld [vmem:[#allocation2 + $0x30] sm:$0xff]
    %v433 = vld [vmem:[#allocation2 + $0x38] sm:$0xff]
    %v434 = vld [vmem:[#allocation2 + $0x40] sm:$0xff]
    %v435 = vld [vmem:[#allocation2 + $0x48] sm:$0xff]
    %v436 = vld [vmem:[#allocation2 + $0x50] sm:$0xff]
    %v437 = vld [vmem:[#allocation2 + $0x58] sm:$0xff]
    %v438 = vld [vmem:[#allocation2 + $0x60] sm:$0xff]
    %v439 = vld [vmem:[#allocation2 + $0x68] sm:$0xff]
    %v440 = vld [vmem:[#allocation2 + $0x70] sm:$0xff]
    %v441 = vld [vmem:[#allocation2 + $0x78] sm:$0xff]
    %v442 = vld [vmem:[#allocation2 + $0x80] sm:$0xff]
    %v443 = vld [vmem:[#allocation2 + $0x88] sm:$0xff]
    %v444 = vld [vmem:[#allocation2 + $0x90] sm:$0xff]
    %v445 = vld [vmem:[#allocation2 + $0x98] sm:$0xff]
    %v446 = vld [vmem:[#allocation2 + $0xa0] sm:$0xff]
    %v447 = vld [vmem:[#allocation2 + $0xa8] sm:$0xff]
    %v448 = vld [vmem:[#allocation2 + $0xb0] sm:$0xff]
    %v449 = vld [vmem:[#allocation2 + $0xb8] sm:$0xff]
    %v450 = vld [vmem:[#allocation2 + $0xc0] sm:$0xff]
    %v451 = vld [vmem:[#allocation2 + $0xc8] sm:$0xff]
    %v452 = vld [vmem:[#allocation2 + $0xd0] sm:$0xff]
    %v453 = vld [vmem:[#allocation2 + $0xd8] sm:$0xff]
    %v454 = vld [vmem:[#allocation2 + $0xe0] sm:$0xff]
    %v455 = vld [vmem:[#allocation2 + $0xe8] sm:$0xff]
    %v456 = vld [vmem:[#allocation2 + $0xf0] sm:$0xff]
    %v457 = vld [vmem:[#allocation2 + $0xf8] sm:$0xff]
    %v458 = vld [vmem:[#allocation2 + $0x100] sm:$0xff]
    %v459 = vld [vmem:[#allocation2 + $0x108] sm:$0xff]
    %v460 = vld [vmem:[#allocation2 + $0x110] sm:$0xff]
    %v461 = vld [vmem:[#allocation2 + $0x118] sm:$0xff]
    %v462 = vld [vmem:[#allocation2 + $0x120] sm:$0xff]
    %v463 = vld [vmem:[#allocation2 + $0x128] sm:$0xff]
    %v464 = vld [vmem:[#allocation2 + $0x130] sm:$0xff]
    %v465 = vld [vmem:[#allocation2 + $0x138] sm:$0xff]
    %v466 = vld [vmem:[#allocation2 + $0x140] sm:$0xff]
    %v467 = vld [vmem:[#allocation2 + $0x148] sm:$0xff]
    %v468 = vld [vmem:[#allocation2 + $0x150] sm:$0xff]
    %v469 = vld [vmem:[#allocation2 + $0x158] sm:$0xff]
    %v470 = vld [vmem:[#allocation2 + $0x160] sm:$0xff]
    %v471 = vld [vmem:[#allocation2 + $0x168] sm:$0xff]
    %v472 = vld [vmem:[#allocation2 + $0x170] sm:$0xff]
    %v473 = vld [vmem:[#allocation2 + $0x178] sm:$0xff]
    %v474 = vld [vmem:[#allocation2 + $0x180] sm:$0xff]
    %v475 = vld [vmem:[#allocation2 + $0x188] sm:$0xff]
    %v476 = vld [vmem:[#allocation2 + $0x190] sm:$0xff]
    %v477 = vld [vmem:[#allocation2 + $0x198] sm:$0xff]
    %v478 = vld [vmem:[#allocation2 + $0x1a0] sm:$0xff]
    %v479 = vld [vmem:[#allocation2 + $0x1a8] sm:$0xff]
    %v480 = vld [vmem:[#allocation2 + $0x1b0] sm:$0xff]
    %v481 = vld [vmem:[#allocation2 + $0x1b8] sm:$0xff]
    %v482 = vld [vmem:[#allocation2 + $0x1c0] sm:$0xff]
    %v483 = vld [vmem:[#allocation2 + $0x1c8] sm:$0xff]
    %v484 = vld [vmem:[#allocation2 + $0x1d0] sm:$0xff]
    %v485 = vld [vmem:[#allocation2 + $0x1d8] sm:$0xff]
    %v486 = vld [vmem:[#allocation2 + $0x1e0] sm:$0xff]
    %v487 = vld [vmem:[#allocation2 + $0x1e8] sm:$0xff]
    %v488 = vld [vmem:[#allocation2 + $0x1f0] sm:$0xff]
    %v489 = vld [vmem:[#allocation2 + $0x1f8] sm:$0xff]
    %v490 = vld [vmem:[#allocation2 + $0x200] sm:$0xff]
    %v491 = vld [vmem:[#allocation2 + $0x208] sm:$0xff]
    %v492 = vld [vmem:[#allocation2 + $0x210] sm:$0xff]
    %v493 = vld [vmem:[#allocation2 + $0x218] sm:$0xff]
    %v494 = vld [vmem:[#allocation2 + $0x220] sm:$0xff]
    %v495 = vld [vmem:[#allocation2 + $0x228] sm:$0xff]
    %v496 = vld [vmem:[#allocation2 + $0x230] sm:$0xff]
    %v497 = vld [vmem:[#allocation2 + $0x238] sm:$0xff]
    %v498 = vld [vmem:[#allocation2 + $0x240] sm:$0xff]
    %v499 = vld [vmem:[#allocation2 + $0x248] sm:$0xff]
    %v500 = vld [vmem:[#allocation2 + $0x250] sm:$0xff]
    %v501 = vld [vmem:[#allocation2 + $0x258] sm:$0xff]
    %v502 = vld [vmem:[#allocation2 + $0x260] sm:$0xff]
    %v503 = vld [vmem:[#allocation2 + $0x268] sm:$0xff]
    %v504 = vld [vmem:[#allocation2 + $0x270] sm:$0xff]
    %v505 = vld [vmem:[#allocation2 + $0x278] sm:$0xff]
    %v506 = vld [vmem:[#allocation2 + $0x280] sm:$0xff]
    %v507 = vld [vmem:[#allocation2 + $0x288] sm:$0xff]
    %v508 = vld [vmem:[#allocation2 + $0x290] sm:$0xff]
    %v509 = vld [vmem:[#allocation2 + $0x298] sm:$0xff]
    %v510 = vld [vmem:[#allocation2 + $0x2a0] sm:$0xff]
    %v511 = vld [vmem:[#allocation2 + $0x2a8] sm:$0xff]
    %v512 = vld [vmem:[#allocation2 + $0x2b0] sm:$0xff]
    %v513 = vld [vmem:[#allocation2 + $0x2b8] sm:$0xff]
    %v514 = vld [vmem:[#allocation2 + $0x2c0] sm:$0xff]
    %v515 = vld [vmem:[#allocation2 + $0x2c8] sm:$0xff]
    %v516 = vld [vmem:[#allocation2 + $0x2d0] sm:$0xff]
    %v517 = vld [vmem:[#allocation2 + $0x2d8] sm:$0xff]
    %v518 = vld [vmem:[#allocation2 + $0x2e0] sm:$0xff]
    %v519 = vld [vmem:[#allocation2 + $0x2e8] sm:$0xff]
    %v520 = vld [vmem:[#allocation2 + $0x2f0] sm:$0xff]
    %v521 = vld [vmem:[#allocation2 + $0x2f8] sm:$0xff]
    %v522 = vld [vmem:[%s6] sm:$0x3f]
    %v524 = vperm.slane %v522, 0
    %v525 = vperm.slane %v522, 1
    %v526 = vperm.slane %v522, 2
    %v527 = vperm.slane %v522, 3
    %v528 = vperm.slane %v522, 4
    %v529 = vperm.slane %v522, 5
    %v632 = vunpack.c.l.b16 %v426
    %v633 = vunpack.c.h.b16 %v426
    %v634 = vunpack.c.l.b16 %v427
    %v635 = vunpack.c.h.b16 %v427
    %v636 = vunpack.c.l.b16 %v428
    %v637 = vunpack.c.h.b16 %v428
    %v638 = vunpack.c.l.b16 %v429
    %v639 = vunpack.c.h.b16 %v429
    %v640 = vunpack.c.l.b16 %v430
    %v641 = vunpack.c.h.b16 %v430
    %v642 = vunpack.c.l.b16 %v431
    %v643 = vunpack.c.h.b16 %v431
    %v644 = vunpack.c.l.b16 %v432
    %v645 = vunpack.c.h.b16 %v432
    %v646 = vunpack.c.l.b16 %v433
    %v647 = vunpack.c.h.b16 %v433
    %v648 = vunpack.c.l.b16 %v434
    %v649 = vunpack.c.h.b16 %v434
    %v650 = vunpack.c.l.b16 %v435
    %v651 = vunpack.c.h.b16 %v435
    %v652 = vunpack.c.l.b16 %v436
    %v653 = vunpack.c.h.b16 %v436
    %v654 = vunpack.c.l.b16 %v437
    %v655 = vunpack.c.h.b16 %v437
    %v656 = vunpack.c.l.b16 %v438
    %v657 = vunpack.c.h.b16 %v438
    %v658 = vunpack.c.l.b16 %v439
    %v659 = vunpack.c.h.b16 %v439
    %v660 = vunpack.c.l.b16 %v440
    %v661 = vunpack.c.h.b16 %v440
    %v662 = vunpack.c.l.b16 %v441
    %v663 = vunpack.c.h.b16 %v441
    %v664 = vunpack.c.l.b16 %v442
    %v665 = vunpack.c.h.b16 %v442
    %v666 = vunpack.c.l.b16 %v443
    %v667 = vunpack.c.h.b16 %v443
    %v668 = vunpack.c.l.b16 %v444
    %v669 = vunpack.c.h.b16 %v444
    %v670 = vunpack.c.l.b16 %v445
    %v671 = vunpack.c.h.b16 %v445
    %v672 = vunpack.c.l.b16 %v446
    %v673 = vunpack.c.h.b16 %v446
    %v674 = vunpack.c.l.b16 %v447
    %v675 = vunpack.c.h.b16 %v447
    %v676 = vunpack.c.l.b16 %v448
    %v677 = vunpack.c.h.b16 %v448
    %v678 = vunpack.c.l.b16 %v449
    %v679 = vunpack.c.h.b16 %v449
    %v680 = vunpack.c.l.b16 %v450
    %v681 = vunpack.c.h.b16 %v450
    %v682 = vunpack.c.l.b16 %v451
    %v683 = vunpack.c.h.b16 %v451
    %v684 = vunpack.c.l.b16 %v452
    %v685 = vunpack.c.h.b16 %v452
    %v686 = vunpack.c.l.b16 %v453
    %v687 = vunpack.c.h.b16 %v453
    %v688 = vunpack.c.l.b16 %v454
    %v689 = vunpack.c.h.b16 %v454
    %v690 = vunpack.c.l.b16 %v455
    %v691 = vunpack.c.h.b16 %v455
    %v692 = vunpack.c.l.b16 %v456
    %v693 = vunpack.c.h.b16 %v456
    %v694 = vunpack.c.l.b16 %v457
    %v695 = vunpack.c.h.b16 %v457
    %v696 = vunpack.c.l.b16 %v458
    %v697 = vunpack.c.h.b16 %v458
    %v698 = vunpack.c.l.b16 %v459
    %v699 = vunpack.c.h.b16 %v459
    %v700 = vunpack.c.l.b16 %v460
    %v701 = vunpack.c.h.b16 %v460
    %v702 = vunpack.c.l.b16 %v461
    %v703 = vunpack.c.h.b16 %v461
    %v704 = vunpack.c.l.b16 %v462
    %v705 = vunpack.c.h.b16 %v462
    %v706 = vunpack.c.l.b16 %v463
    %v707 = vunpack.c.h.b16 %v463
    %v708 = vunpack.c.l.b16 %v464
    %v709 = vunpack.c.h.b16 %v464
    %v710 = vunpack.c.l.b16 %v465
    %v711 = vunpack.c.h.b16 %v465
    %v712 = vunpack.c.l.b16 %v466
    %v713 = vunpack.c.h.b16 %v466
    %v714 = vunpack.c.l.b16 %v467
    %v715 = vunpack.c.h.b16 %v467
    %v716 = vunpack.c.l.b16 %v468
    %v717 = vunpack.c.h.b16 %v468
    %v718 = vunpack.c.l.b16 %v469
    %v719 = vunpack.c.h.b16 %v469
    %v720 = vunpack.c.l.b16 %v470
    %v721 = vunpack.c.h.b16 %v470
    %v722 = vunpack.c.l.b16 %v471
    %v723 = vunpack.c.h.b16 %v471
    %v724 = vunpack.c.l.b16 %v472
    %v725 = vunpack.c.h.b16 %v472
    %v726 = vunpack.c.l.b16 %v473
    %v727 = vunpack.c.h.b16 %v473
    %v728 = vunpack.c.l.b16 %v474
    %v729 = vunpack.c.h.b16 %v474
    %v730 = vunpack.c.l.b16 %v475
    %v731 = vunpack.c.h.b16 %v475
    %v732 = vunpack.c.l.b16 %v476
    %v733 = vunpack.c.h.b16 %v476
    %v734 = vunpack.c.l.b16 %v477
    %v735 = vunpack.c.h.b16 %v477
    %v736 = vunpack.c.l.b16 %v478
    %v737 = vunpack.c.h.b16 %v478
    %v738 = vunpack.c.l.b16 %v479
    %v739 = vunpack.c.h.b16 %v479
    %v740 = vunpack.c.l.b16 %v480
    %v741 = vunpack.c.h.b16 %v480
    %v742 = vunpack.c.l.b16 %v481
    %v743 = vunpack.c.h.b16 %v481
    %v744 = vunpack.c.l.b16 %v482
    %v745 = vunpack.c.h.b16 %v482
    %v746 = vunpack.c.l.b16 %v483
    %v747 = vunpack.c.h.b16 %v483
    %v748 = vunpack.c.l.b16 %v484
    %v749 = vunpack.c.h.b16 %v484
    %v750 = vunpack.c.l.b16 %v485
    %v751 = vunpack.c.h.b16 %v485
    %v752 = vunpack.c.l.b16 %v486
    %v753 = vunpack.c.h.b16 %v486
    %v754 = vunpack.c.l.b16 %v487
    %v755 = vunpack.c.h.b16 %v487
    %v756 = vunpack.c.l.b16 %v488
    %v757 = vunpack.c.h.b16 %v488
    %v758 = vunpack.c.l.b16 %v489
    %v759 = vunpack.c.h.b16 %v489
    %v760 = vunpack.c.l.b16 %v490
    %v761 = vunpack.c.h.b16 %v490
    %v762 = vunpack.c.l.b16 %v491
    %v763 = vunpack.c.h.b16 %v491
    %v764 = vunpack.c.l.b16 %v492
    %v765 = vunpack.c.h.b16 %v492
    %v766 = vunpack.c.l.b16 %v493
    %v767 = vunpack.c.h.b16 %v493
    %v768 = vunpack.c.l.b16 %v494
    %v769 = vunpack.c.h.b16 %v494
    %v770 = vunpack.c.l.b16 %v495
    %v771 = vunpack.c.h.b16 %v495
    %v772 = vunpack.c.l.b16 %v496
    %v773 = vunpack.c.h.b16 %v496
    %v774 = vunpack.c.l.b16 %v497
    %v775 = vunpack.c.h.b16 %v497
    %v776 = vunpack.c.l.b16 %v498
    %v777 = vunpack.c.h.b16 %v498
    %v778 = vunpack.c.l.b16 %v499
    %v779 = vunpack.c.h.b16 %v499
    %v780 = vunpack.c.l.b16 %v500
    %v781 = vunpack.c.h.b16 %v500
    %v782 = vunpack.c.l.b16 %v501
    %v783 = vunpack.c.h.b16 %v501
    %v784 = vunpack.c.l.b16 %v502
    %v785 = vunpack.c.h.b16 %v502
    %v786 = vunpack.c.l.b16 %v503
    %v787 = vunpack.c.h.b16 %v503
    %v788 = vunpack.c.l.b16 %v504
    %v789 = vunpack.c.h.b16 %v504
    %v790 = vunpack.c.l.b16 %v505
    %v791 = vunpack.c.h.b16 %v505
    %v792 = vunpack.c.l.b16 %v506
    %v793 = vunpack.c.h.b16 %v506
    %v794 = vunpack.c.l.b16 %v507
    %v795 = vunpack.c.h.b16 %v507
    %v796 = vunpack.c.l.b16 %v508
    %v797 = vunpack.c.h.b16 %v508
    %v798 = vunpack.c.l.b16 %v509
    %v799 = vunpack.c.h.b16 %v509
    %v800 = vunpack.c.l.b16 %v510
    %v801 = vunpack.c.h.b16 %v510
    %v802 = vunpack.c.l.b16 %v511
    %v803 = vunpack.c.h.b16 %v511
    %v804 = vunpack.c.l.b16 %v512
    %v805 = vunpack.c.h.b16 %v512
    %v806 = vunpack.c.l.b16 %v513
    %v807 = vunpack.c.h.b16 %v513
    %v808 = vunpack.c.l.b16 %v514
    %v809 = vunpack.c.h.b16 %v514
    %v810 = vunpack.c.l.b16 %v515
    %v811 = vunpack.c.h.b16 %v515
    %v812 = vunpack.c.l.b16 %v516
    %v813 = vunpack.c.h.b16 %v516
    %v814 = vunpack.c.l.b16 %v517
    %v815 = vunpack.c.h.b16 %v517
    %v816 = vunpack.c.l.b16 %v518
    %v817 = vunpack.c.h.b16 %v518
    %v818 = vunpack.c.l.b16 %v519
    %v819 = vunpack.c.h.b16 %v519
    %v820 = vunpack.c.l.b16 %v520
    %v821 = vunpack.c.h.b16 %v520
    %v822 = vunpack.c.l.b16 %v521
    %v823 = vunpack.c.h.b16 %v521
    %v824 = vpack.c.b16 %v638, %v632
    %v825 = vpack.c.b16 %v639, %v633
    %v826 = vpack.c.b16 %v640, %v634
    %v827 = vpack.c.b16 %v641, %v635
    %v828 = vpack.c.b16 %v642, %v636
    %v829 = vpack.c.b16 %v643, %v637
    %v830 = vpack.c.b16 %v650, %v644
    %v831 = vpack.c.b16 %v651, %v645
    %v832 = vpack.c.b16 %v652, %v646
    %v833 = vpack.c.b16 %v653, %v647
    %v834 = vpack.c.b16 %v654, %v648
    %v835 = vpack.c.b16 %v655, %v649
    %v836 = vpack.c.b16 %v662, %v656
    %v837 = vpack.c.b16 %v663, %v657
    %v838 = vpack.c.b16 %v664, %v658
    %v839 = vpack.c.b16 %v665, %v659
    %v840 = vpack.c.b16 %v666, %v660
    %v841 = vpack.c.b16 %v667, %v661
    %v842 = vpack.c.b16 %v674, %v668
    %v843 = vpack.c.b16 %v675, %v669
    %v844 = vpack.c.b16 %v676, %v670
    %v845 = vpack.c.b16 %v677, %v671
    %v846 = vpack.c.b16 %v678, %v672
    %v847 = vpack.c.b16 %v679, %v673
    %v848 = vpack.c.b16 %v686, %v680
    %v849 = vpack.c.b16 %v687, %v681
    %v850 = vpack.c.b16 %v688, %v682
    %v851 = vpack.c.b16 %v689, %v683
    %v852 = vpack.c.b16 %v690, %v684
    %v853 = vpack.c.b16 %v691, %v685
    %v854 = vpack.c.b16 %v698, %v692
    %v855 = vpack.c.b16 %v699, %v693
    %v856 = vpack.c.b16 %v700, %v694
    %v857 = vpack.c.b16 %v701, %v695
    %v858 = vpack.c.b16 %v702, %v696
    %v859 = vpack.c.b16 %v703, %v697
    %v860 = vpack.c.b16 %v710, %v704
    %v861 = vpack.c.b16 %v711, %v705
    %v862 = vpack.c.b16 %v712, %v706
    %v863 = vpack.c.b16 %v713, %v707
    %v864 = vpack.c.b16 %v714, %v708
    %v865 = vpack.c.b16 %v715, %v709
    %v866 = vpack.c.b16 %v722, %v716
    %v867 = vpack.c.b16 %v723, %v717
    %v868 = vpack.c.b16 %v724, %v718
    %v869 = vpack.c.b16 %v725, %v719
    %v870 = vpack.c.b16 %v726, %v720
    %v871 = vpack.c.b16 %v727, %v721
    %v872 = vpack.c.b16 %v734, %v728
    %v873 = vpack.c.b16 %v735, %v729
    %v874 = vpack.c.b16 %v736, %v730
    %v875 = vpack.c.b16 %v737, %v731
    %v876 = vpack.c.b16 %v738, %v732
    %v877 = vpack.c.b16 %v739, %v733
    %v878 = vpack.c.b16 %v746, %v740
    %v879 = vpack.c.b16 %v747, %v741
    %v880 = vpack.c.b16 %v748, %v742
    %v881 = vpack.c.b16 %v749, %v743
    %v882 = vpack.c.b16 %v750, %v744
    %v883 = vpack.c.b16 %v751, %v745
    %v884 = vpack.c.b16 %v758, %v752
    %v885 = vpack.c.b16 %v759, %v753
    %v886 = vpack.c.b16 %v760, %v754
    %v887 = vpack.c.b16 %v761, %v755
    %v888 = vpack.c.b16 %v762, %v756
    %v889 = vpack.c.b16 %v763, %v757
    %v890 = vpack.c.b16 %v770, %v764
    %v891 = vpack.c.b16 %v771, %v765
    %v892 = vpack.c.b16 %v772, %v766
    %v893 = vpack.c.b16 %v773, %v767
    %v894 = vpack.c.b16 %v774, %v768
    %v895 = vpack.c.b16 %v775, %v769
    %v896 = vpack.c.b16 %v782, %v776
    %v897 = vpack.c.b16 %v783, %v777
    %v898 = vpack.c.b16 %v784, %v778
    %v899 = vpack.c.b16 %v785, %v779
    %v900 = vpack.c.b16 %v786, %v780
    %v901 = vpack.c.b16 %v787, %v781
    %v902 = vpack.c.b16 %v794, %v788
    %v903 = vpack.c.b16 %v795, %v789
    %v904 = vpack.c.b16 %v796, %v790
    %v905 = vpack.c.b16 %v797, %v791
    %v906 = vpack.c.b16 %v798, %v792
    %v907 = vpack.c.b16 %v799, %v793
    %v908 = vpack.c.b16 %v806, %v800
    %v909 = vpack.c.b16 %v807, %v801
    %v910 = vpack.c.b16 %v808, %v802
    %v911 = vpack.c.b16 %v809, %v803
    %v912 = vpack.c.b16 %v810, %v804
    %v913 = vpack.c.b16 %v811, %v805
    %v914 = vpack.c.b16 %v818, %v812
    %v915 = vpack.c.b16 %v819, %v813
    %v916 = vpack.c.b16 %v820, %v814
    %v917 = vpack.c.b16 %v821, %v815
    %v918 = vpack.c.b16 %v822, %v816
    %v919 = vpack.c.b16 %v823, %v817
    %1016 = vmatpush.bf16.msra.mxu0 %v866
    %1017 = vmatpush.bf16.msra.mxu0 %v860
    %1018 = vmatpush.bf16.msra.mxu0 %v854
    %1019 = vmatpush.bf16.msra.mxu0 %v848
    %1020 = vmatpush.bf16.msra.mxu0 %v842
    %1021 = vmatpush.bf16.msra.mxu0 %v836
    %1022 = vmatpush.bf16.msra.mxu0 %v830
    %1023 = vmatpush.bf16.msra.mxu0 %v824
    %1024 = vmatmul.bf16.gmra.mxu0 %v424
    %v1025 = vpop.f32.mrf.mxu0
    %v1026 = vadd.f32 %v524, %v1025
    %v1027 = vpop.f32.mrf.mxu0
    %1028 = vdwg.mxu0
    %1029 = vmatpush.bf16.msra.mxu0 %v914
    %1030 = vmatpush.bf16.msra.mxu0 %v908
    %1031 = vmatpush.bf16.msra.mxu0 %v902
    %1032 = vmatpush.bf16.msra.mxu0 %v896
    %1033 = vmatpush.bf16.msra.mxu0 %v890
    %1034 = vmatpush.bf16.msra.mxu0 %v884
    %1035 = vmatpush.bf16.msra.mxu0 %v878
    %1036 = vmatpush.bf16.msra.mxu0 %v872
    %1037 = vmatmul.bf16.gmra.mxu0 %v425
    %v1038 = vpop.f32.mrf.mxu0
    %v1039 = vadd.f32 %v1026, %v1038
    %v1040 = vpop.f32.mrf.mxu0
    %1041 = vdwg.mxu0
    %1042 = vmatpush.bf16.msra.mxu0 %v867
    %1043 = vmatpush.bf16.msra.mxu0 %v861
    %1044 = vmatpush.bf16.msra.mxu0 %v855
    %1045 = vmatpush.bf16.msra.mxu0 %v849
    %1046 = vmatpush.bf16.msra.mxu0 %v843
    %1047 = vmatpush.bf16.msra.mxu0 %v837
    %1048 = vmatpush.bf16.msra.mxu0 %v831
    %1049 = vmatpush.bf16.msra.mxu0 %v825
    %1050 = vmatmul.bf16.gmra.mxu0 %v424
    %v1051 = vpop.f32.mrf.mxu0
    %v1052 = vadd.f32 %v525, %v1051
    %v1053 = vpop.f32.mrf.mxu0
    %1054 = vdwg.mxu0
    %1055 = vmatpush.bf16.msra.mxu0 %v915
    %1056 = vmatpush.bf16.msra.mxu0 %v909
    %1057 = vmatpush.bf16.msra.mxu0 %v903
    %1058 = vmatpush.bf16.msra.mxu0 %v897
    %1059 = vmatpush.bf16.msra.mxu0 %v891
    %1060 = vmatpush.bf16.msra.mxu0 %v885
    %1061 = vmatpush.bf16.msra.mxu0 %v879
    %1062 = vmatpush.bf16.msra.mxu0 %v873
    %1063 = vmatmul.bf16.gmra.mxu0 %v425
    %v1064 = vpop.f32.mrf.mxu0
    %v1065 = vadd.f32 %v1052, %v1064
    %v1066 = vpop.f32.mrf.mxu0
    %1067 = vdwg.mxu0
    %1068 = vmatpush.bf16.msra.mxu0 %v868
    %1069 = vmatpush.bf16.msra.mxu0 %v862
    %1070 = vmatpush.bf16.msra.mxu0 %v856
    %1071 = vmatpush.bf16.msra.mxu0 %v850
    %1072 = vmatpush.bf16.msra.mxu0 %v844
    %1073 = vmatpush.bf16.msra.mxu0 %v838
    %1074 = vmatpush.bf16.msra.mxu0 %v832
    %1075 = vmatpush.bf16.msra.mxu0 %v826
    %1076 = vmatmul.bf16.gmra.mxu0 %v424
    %v1077 = vpop.f32.mrf.mxu0
    %v1078 = vadd.f32 %v526, %v1077
    %v1079 = vpop.f32.mrf.mxu0
    %1080 = vdwg.mxu0
    %1081 = vmatpush.bf16.msra.mxu0 %v916
    %1082 = vmatpush.bf16.msra.mxu0 %v910
    %1083 = vmatpush.bf16.msra.mxu0 %v904
    %1084 = vmatpush.bf16.msra.mxu0 %v898
    %1085 = vmatpush.bf16.msra.mxu0 %v892
    %1086 = vmatpush.bf16.msra.mxu0 %v886
    %1087 = vmatpush.bf16.msra.mxu0 %v880
    %1088 = vmatpush.bf16.msra.mxu0 %v874
    %1089 = vmatmul.bf16.gmra.mxu0 %v425
    %v1090 = vpop.f32.mrf.mxu0
    %v1091 = vadd.f32 %v1078, %v1090
    %v1092 = vpop.f32.mrf.mxu0
    %1093 = vdwg.mxu0
    %1094 = vmatpush.bf16.msra.mxu0 %v869
    %1095 = vmatpush.bf16.msra.mxu0 %v863
    %1096 = vmatpush.bf16.msra.mxu0 %v857
    %1097 = vmatpush.bf16.msra.mxu0 %v851
    %1098 = vmatpush.bf16.msra.mxu0 %v845
    %1099 = vmatpush.bf16.msra.mxu0 %v839
    %1100 = vmatpush.bf16.msra.mxu0 %v833
    %1101 = vmatpush.bf16.msra.mxu0 %v827
    %1102 = vmatmul.bf16.gmra.mxu0 %v424
    %v1103 = vpop.f32.mrf.mxu0
    %v1104 = vadd.f32 %v527, %v1103
    %v1105 = vpop.f32.mrf.mxu0
    %1106 = vdwg.mxu0
    %1107 = vmatpush.bf16.msra.mxu0 %v917
    %1108 = vmatpush.bf16.msra.mxu0 %v911
    %1109 = vmatpush.bf16.msra.mxu0 %v905
    %1110 = vmatpush.bf16.msra.mxu0 %v899
    %1111 = vmatpush.bf16.msra.mxu0 %v893
    %1112 = vmatpush.bf16.msra.mxu0 %v887
    %1113 = vmatpush.bf16.msra.mxu0 %v881
    %1114 = vmatpush.bf16.msra.mxu0 %v875
    %1115 = vmatmul.bf16.gmra.mxu0 %v425
    %v1116 = vpop.f32.mrf.mxu0
    %v1117 = vadd.f32 %v1104, %v1116
    %v1118 = vpop.f32.mrf.mxu0
    %1119 = vdwg.mxu0
    %1120 = vmatpush.bf16.msra.mxu0 %v870
    %1121 = vmatpush.bf16.msra.mxu0 %v864
    %1122 = vmatpush.bf16.msra.mxu0 %v858
    %1123 = vmatpush.bf16.msra.mxu0 %v852
    %1124 = vmatpush.bf16.msra.mxu0 %v846
    %1125 = vmatpush.bf16.msra.mxu0 %v840
    %1126 = vmatpush.bf16.msra.mxu0 %v834
    %1127 = vmatpush.bf16.msra.mxu0 %v828
    %1128 = vmatmul.bf16.gmra.mxu0 %v424
    %v1129 = vpop.f32.mrf.mxu0
    %v1130 = vadd.f32 %v528, %v1129
    %v1131 = vpop.f32.mrf.mxu0
    %1132 = vdwg.mxu0
    %1133 = vmatpush.bf16.msra.mxu0 %v918
    %1134 = vmatpush.bf16.msra.mxu0 %v912
    %1135 = vmatpush.bf16.msra.mxu0 %v906
    %1136 = vmatpush.bf16.msra.mxu0 %v900
    %1137 = vmatpush.bf16.msra.mxu0 %v894
    %1138 = vmatpush.bf16.msra.mxu0 %v888
    %1139 = vmatpush.bf16.msra.mxu0 %v882
    %1140 = vmatpush.bf16.msra.mxu0 %v876
    %1141 = vmatmul.bf16.gmra.mxu0 %v425
    %v1142 = vpop.f32.mrf.mxu0
    %v1143 = vadd.f32 %v1130, %v1142
    %v1144 = vpop.f32.mrf.mxu0
    %1145 = vdwg.mxu0
    %1146 = vmatpush.bf16.msra.mxu0 %v871
    %1147 = vmatpush.bf16.msra.mxu0 %v865
    %1148 = vmatpush.bf16.msra.mxu0 %v859
    %1149 = vmatpush.bf16.msra.mxu0 %v853
    %1150 = vmatpush.bf16.msra.mxu0 %v847
    %1151 = vmatpush.bf16.msra.mxu0 %v841
    %1152 = vmatpush.bf16.msra.mxu0 %v835
    %1153 = vmatpush.bf16.msra.mxu0 %v829
    %1154 = vmatmul.bf16.gmra.mxu0 %v424
    %v1155 = vpop.f32.mrf.mxu0
    %v1156 = vadd.f32 %v529, %v1155
    %v1157 = vpop.f32.mrf.mxu0
    %1158 = vdwg.mxu0
    %1159 = vmatpush.bf16.msra.mxu0 %v919
    %1160 = vmatpush.bf16.msra.mxu0 %v913
    %1161 = vmatpush.bf16.msra.mxu0 %v907
    %1162 = vmatpush.bf16.msra.mxu0 %v901
    %1163 = vmatpush.bf16.msra.mxu0 %v895
    %1164 = vmatpush.bf16.msra.mxu0 %v889
    %1165 = vmatpush.bf16.msra.mxu0 %v883
    %1166 = vmatpush.bf16.msra.mxu0 %v877
    %1167 = vmatmul.bf16.gmra.mxu0 %v425
    %v1168 = vpop.f32.mrf.mxu0
    %v1169 = vadd.f32 %v1156, %v1168
    %v1170 = vpop.f32.mrf.mxu0
    %1171 = vdwg.mxu0
    %vm1172 = vcmp.ge.f32.partialorder %v1039, 0.0
    %vm1173 = vcmp.ge.f32.partialorder %v1065, 0.0
    %vm1174 = vcmp.ge.f32.partialorder %v1091, 0.0
    %vm1175 = vcmp.ge.f32.partialorder %v1117, 0.0
    %vm1176 = vcmp.ge.f32.partialorder %v1143, 0.0
    %vm1177 = vcmp.ge.f32.partialorder %v1169, 0.0
    %v1178 = vmul.f32 %v1039, 0.01
    %v1179 = vmul.f32 %v1065, 0.01
    %v1180 = vmul.f32 %v1091, 0.01
    %v1181 = vmul.f32 %v1117, 0.01
    %v1182 = vmul.f32 %v1143, 0.01
    %v1183 = vmul.f32 %v1169, 0.01
    %v1184 = vsel %vm1172, %v1039, %v1178
    %v1185 = vsel %vm1173, %v1065, %v1179
    %v1186 = vsel %vm1174, %v1091, %v1180
    %v1187 = vsel %vm1175, %v1117, %v1181
    %v1188 = vsel %vm1176, %v1143, %v1182
    %v1189 = vsel %vm1177, %v1169, %v1183
    %v1190 = vpack.c.bf16 %v1184, %v1184
    %v1191 = vpack.c.bf16 %v1185, %v1185
    %v1192 = vpack.c.bf16 %v1186, %v1186
    %v1193 = vpack.c.bf16 %v1187, %v1187
    %v1194 = vpack.c.bf16 %v1188, %v1188
    %v1195 = vpack.c.bf16 %v1189, %v1189
    %v1196 = vld [vmem:[%s7] sm:$0xf]
    %v1197 = vld [vmem:[%s7 + $0x4] sm:$0xf]
    %v1198 = vld [vmem:[%s7 + $0x8] sm:$0xf]
    %v1199 = vld [vmem:[%s7 + $0xc] sm:$0xf]
    %v1200 = vld [vmem:[%s7 + $0x10] sm:$0xf]
    %v1201 = vld [vmem:[%s7 + $0x14] sm:$0xf]
    %v1202 = vld [vmem:[%s7 + $0x18] sm:$0xf]
    %v1203 = vld [vmem:[%s7 + $0x1c] sm:$0xf]
    %v1204 = vld [vmem:[%s7 + $0x20] sm:$0xf]
    %v1205 = vld [vmem:[%s7 + $0x24] sm:$0xf]
    %v1206 = vld [vmem:[%s7 + $0x28] sm:$0xf]
    %v1207 = vld [vmem:[%s7 + $0x2c] sm:$0xf]
    %v1208 = vld [vmem:[%s7 + $0x30] sm:$0xf]
    %v1209 = vld [vmem:[%s7 + $0x34] sm:$0xf]
    %v1210 = vld [vmem:[%s7 + $0x38] sm:$0xf]
    %v1211 = vld [vmem:[%s7 + $0x3c] sm:$0xf]
    %v1212 = vld [vmem:[%s7 + $0x40] sm:$0xf]
    %v1213 = vld [vmem:[%s7 + $0x44] sm:$0xf]
    %v1214 = vld [vmem:[%s7 + $0x48] sm:$0xf]
    %v1215 = vld [vmem:[%s7 + $0x4c] sm:$0xf]
    %v1216 = vld [vmem:[%s7 + $0x50] sm:$0xf]
    %v1217 = vld [vmem:[%s7 + $0x54] sm:$0xf]
    %v1218 = vld [vmem:[%s7 + $0x58] sm:$0xf]
    %v1219 = vld [vmem:[%s7 + $0x5c] sm:$0xf]
    %v1220 = vld [vmem:[%s7 + $0x60] sm:$0xf]
    %v1221 = vld [vmem:[%s7 + $0x64] sm:$0xf]
    %v1222 = vld [vmem:[%s7 + $0x68] sm:$0xf]
    %v1223 = vld [vmem:[%s7 + $0x6c] sm:$0xf]
    %v1224 = vld [vmem:[%s7 + $0x70] sm:$0xf]
    %v1225 = vld [vmem:[%s7 + $0x74] sm:$0xf]
    %v1226 = vld [vmem:[%s7 + $0x78] sm:$0xf]
    %v1227 = vld [vmem:[%s7 + $0x7c] sm:$0xf]
    %v1228 = vld [vmem:[%s8] sm:$0x1]
    %v1230 = vperm.slane %v1228, 0
    %v1264 = vunpack.c.l.b16 %v1196
    %v1265 = vunpack.c.l.b16 %v1197
    %v1266 = vunpack.c.l.b16 %v1198
    %v1267 = vunpack.c.l.b16 %v1199
    %v1268 = vunpack.c.l.b16 %v1200
    %v1269 = vunpack.c.l.b16 %v1201
    %v1270 = vunpack.c.l.b16 %v1202
    %v1271 = vunpack.c.l.b16 %v1203
    %v1272 = vunpack.c.l.b16 %v1204
    %v1273 = vunpack.c.l.b16 %v1205
    %v1274 = vunpack.c.l.b16 %v1206
    %v1275 = vunpack.c.l.b16 %v1207
    %v1276 = vunpack.c.l.b16 %v1208
    %v1277 = vunpack.c.l.b16 %v1209
    %v1278 = vunpack.c.l.b16 %v1210
    %v1279 = vunpack.c.l.b16 %v1211
    %v1280 = vunpack.c.l.b16 %v1212
    %v1281 = vunpack.c.l.b16 %v1213
    %v1282 = vunpack.c.l.b16 %v1214
    %v1283 = vunpack.c.l.b16 %v1215
    %v1284 = vunpack.c.l.b16 %v1216
    %v1285 = vunpack.c.l.b16 %v1217
    %v1286 = vunpack.c.l.b16 %v1218
    %v1287 = vunpack.c.l.b16 %v1219
    %v1288 = vunpack.c.l.b16 %v1220
    %v1289 = vunpack.c.l.b16 %v1221
    %v1290 = vunpack.c.l.b16 %v1222
    %v1291 = vunpack.c.l.b16 %v1223
    %v1292 = vunpack.c.l.b16 %v1224
    %v1293 = vunpack.c.l.b16 %v1225
    %v1294 = vunpack.c.l.b16 %v1226
    %v1295 = vunpack.c.l.b16 %v1227
    %v1296 = vpack.c.b16 %v1265, %v1264
    %v1297 = vpack.c.b16 %v1267, %v1266
    %v1298 = vpack.c.b16 %v1269, %v1268
    %v1299 = vpack.c.b16 %v1271, %v1270
    %v1300 = vpack.c.b16 %v1273, %v1272
    %v1301 = vpack.c.b16 %v1275, %v1274
    %v1302 = vpack.c.b16 %v1277, %v1276
    %v1303 = vpack.c.b16 %v1279, %v1278
    %v1304 = vpack.c.b16 %v1281, %v1280
    %v1305 = vpack.c.b16 %v1283, %v1282
    %v1306 = vpack.c.b16 %v1285, %v1284
    %v1307 = vpack.c.b16 %v1287, %v1286
    %v1308 = vpack.c.b16 %v1289, %v1288
    %v1309 = vpack.c.b16 %v1291, %v1290
    %v1310 = vpack.c.b16 %v1293, %v1292
    %v1311 = vpack.c.b16 %v1295, %v1294
    %1328 = vmatpush.bf16.msra.mxu0 %v1303
    %1329 = vmatpush.bf16.msra.mxu0 %v1302
    %1330 = vmatpush.bf16.msra.mxu0 %v1301
    %1331 = vmatpush.bf16.msra.mxu0 %v1300
    %1332 = vmatpush.bf16.msra.mxu0 %v1299
    %1333 = vmatpush.bf16.msra.mxu0 %v1298
    %1334 = vmatpush.bf16.msra.mxu0 %v1297
    %1335 = vmatpush.bf16.msra.mxu0 %v1296
    %1336 = vmatmul.bf16.gmra.mxu0 %v1190
    %v1337 = vpop.f32.mrf.mxu0
    %v1338 = vadd.f32 %v1230, %v1337
    %v1339 = vpop.f32.mrf.mxu0
    %1340 = vdwg.mxu0
    %1341 = vmatpush.bf16.msra.mxu0 %v1311
    %1342 = vmatpush.bf16.msra.mxu0 %v1310
    %1343 = vmatpush.bf16.msra.mxu0 %v1309
    %1344 = vmatpush.bf16.msra.mxu0 %v1308
    %1345 = vmatpush.bf16.msra.mxu0 %v1307
    %1346 = vmatpush.bf16.msra.mxu0 %v1306
    %1347 = vmatpush.bf16.msra.mxu0 %v1305
    %1348 = vmatpush.bf16.msra.mxu0 %v1304
    %1349 = vmatmul.bf16.gmra.mxu0 %v1191
    %v1350 = vpop.f32.mrf.mxu0
    %v1351 = vadd.f32 %v1338, %v1350
    %v1352 = vpop.f32.mrf.mxu0
    %1353 = vdwg.mxu0
    %vm1354 = vcmask 15360
    %v1355 = vsel %vm1354, %v1351, -inf
    %1356 = vmax.xlane.f32.xlu0 %v1355
    %v1357 = vpop.xlane.xlu0 %1356
    %v1358 = vsub.f32 %v1351, %v1357
    %v1359 = vmul.f32 %v1358, 1.442695
    %v1360 = vpow.pop %v1359
    %v1361 = vsel %vm1354, %v1360, 0.0
    %1362 = vadd.xlane.f32.xlu0 %v1361
    %v1363 = vpop.xlane.xlu0 %1362
    %v1364 = vrcp.pop %v1363
    %v1365 = vmul.f32 %v1360, %v1364
    %vm1366 = vcmask 31760
    %v1367 = vsel %vm1366, %v1351, -inf
    %1368 = vmax.xlane.f32.xlu0 %v1367
    %v1369 = vpop.xlane.xlu0 %1368
    %v1370 = vsub.f32 %v1351, %v1369
    %v1371 = vmul.f32 %v1370, 1.442695
    %v1372 = vpow.pop %v1371
    %1374 = vrot.lane.b32.xlu0 %v1372, 126
    %v1375 = vpop.permute.xlu0 %1374
    %v1377 = vsel %vm1354, %v1375, 0.0
    %1378 = vadd.xlane.f32.xlu0 %v1377
    %v1379 = vpop.xlane.xlu0 %1378
    %v1380 = vrcp.pop %v1379
    %v1381 = vmul.f32 %v1372, %v1380
    %v1382 = vld [vmem:[#allocation5] sm:$0xff]
    %v1383 = vld [vmem:[#allocation5 + $0x8] sm:$0xf]
    %v1384 = vld [vmem:[#allocation5 + $0xc] sm:$0xff]
    %v1385 = vld [vmem:[#allocation5 + $0x14] sm:$0xf]
    %v1386 = vld [vmem:[#allocation5 + $0x18] sm:$0xff]
    %v1387 = vld [vmem:[#allocation5 + $0x20] sm:$0xf]
    %v1388 = vld [vmem:[#allocation5 + $0x24] sm:$0xff]
    %v1389 = vld [vmem:[#allocation5 + $0x2c] sm:$0xf]
    %v1390 = vld [vmem:[#allocation5 + $0x30] sm:$0xff]
    %v1391 = vld [vmem:[#allocation5 + $0x38] sm:$0xf]
    %v1392 = vld [vmem:[#allocation5 + $0x3c] sm:$0xff]
    %v1393 = vld [vmem:[#allocation5 + $0x44] sm:$0xf]
    %v1394 = vld [vmem:[#allocation5 + $0x48] sm:$0xff]
    %v1395 = vld [vmem:[#allocation5 + $0x50] sm:$0xf]
    %v1396 = vld [vmem:[#allocation5 + $0x54] sm:$0xff]
    %v1397 = vld [vmem:[#allocation5 + $0x5c] sm:$0xf]
    %v1398 = vld [vmem:[#allocation5 + $0x60] sm:$0xff]
    %v1399 = vld [vmem:[#allocation5 + $0x68] sm:$0xf]
    %v1400 = vld [vmem:[#allocation5 + $0x6c] sm:$0xff]
    %v1401 = vld [vmem:[#allocation5 + $0x74] sm:$0xf]
    %v1402 = vld [vmem:[#allocation5 + $0x78] sm:$0xff]
    %v1403 = vld [vmem:[#allocation5 + $0x80] sm:$0xf]
    %v1404 = vld [vmem:[#allocation5 + $0x84] sm:$0xff]
    %v1405 = vld [vmem:[#allocation5 + $0x8c] sm:$0xf]
    %v1406 = vld [vmem:[#allocation5 + $0x90] sm:$0xff]
    %v1407 = vld [vmem:[#allocation5 + $0x98] sm:$0xf]
    %v1408 = vld [vmem:[#allocation5 + $0x9c] sm:$0xff]
    %v1409 = vld [vmem:[#allocation5 + $0xa4] sm:$0xf]
    %v1410 = vld [vmem:[#allocation5 + $0xa8] sm:$0xff]
    %v1411 = vld [vmem:[#allocation5 + $0xb0] sm:$0xf]
    %v1412 = vld [vmem:[#allocation5 + $0xb4] sm:$0xff]
    %v1413 = vld [vmem:[#allocation5 + $0xbc] sm:$0xf]
    %v1414 = vld [vmem:[#allocation5 + $0xc0] sm:$0xff]
    %v1415 = vld [vmem:[#allocation5 + $0xc8] sm:$0xf]
    %v1416 = vld [vmem:[#allocation5 + $0xcc] sm:$0xff]
    %v1417 = vld [vmem:[#allocation5 + $0xd4] sm:$0xf]
    %v1418 = vld [vmem:[#allocation5 + $0xd8] sm:$0xff]
    %v1419 = vld [vmem:[#allocation5 + $0xe0] sm:$0xf]
    %v1420 = vld [vmem:[#allocation5 + $0xe4] sm:$0xff]
    %v1421 = vld [vmem:[#allocation5 + $0xec] sm:$0xf]
    %v1422 = vld [vmem:[#allocation5 + $0xf0] sm:$0xff]
    %v1423 = vld [vmem:[#allocation5 + $0xf8] sm:$0xf]
    %v1424 = vld [vmem:[#allocation5 + $0xfc] sm:$0xff]
    %v1425 = vld [vmem:[#allocation5 + $0x104] sm:$0xf]
    %v1426 = vld [vmem:[#allocation5 + $0x108] sm:$0xff]
    %v1427 = vld [vmem:[#allocation5 + $0x110] sm:$0xf]
    %v1428 = vld [vmem:[#allocation5 + $0x114] sm:$0xff]
    %v1429 = vld [vmem:[#allocation5 + $0x11c] sm:$0xf]
    %v1430 = vld [vmem:[#allocation5 + $0x120] sm:$0xff]
    %v1431 = vld [vmem:[#allocation5 + $0x128] sm:$0xf]
    %v1432 = vld [vmem:[#allocation5 + $0x12c] sm:$0xff]
    %v1433 = vld [vmem:[#allocation5 + $0x134] sm:$0xf]
    %v1434 = vld [vmem:[#allocation5 + $0x138] sm:$0xff]
    %v1435 = vld [vmem:[#allocation5 + $0x140] sm:$0xf]
    %v1436 = vld [vmem:[#allocation5 + $0x144] sm:$0xff]
    %v1437 = vld [vmem:[#allocation5 + $0x14c] sm:$0xf]
    %v1438 = vld [vmem:[#allocation5 + $0x150] sm:$0xff]
    %v1439 = vld [vmem:[#allocation5 + $0x158] sm:$0xf]
    %v1440 = vld [vmem:[#allocation5 + $0x15c] sm:$0xff]
    %v1441 = vld [vmem:[#allocation5 + $0x164] sm:$0xf]
    %v1442 = vld [vmem:[#allocation5 + $0x168] sm:$0xff]
    %v1443 = vld [vmem:[#allocation5 + $0x170] sm:$0xf]
    %v1444 = vld [vmem:[#allocation5 + $0x174] sm:$0xff]
    %v1445 = vld [vmem:[#allocation5 + $0x17c] sm:$0xf]
    %v1446 = vld [vmem:[#allocation5 + $0x180] sm:$0xff]
    %v1447 = vld [vmem:[#allocation5 + $0x188] sm:$0xf]
    %v1448 = vld [vmem:[#allocation5 + $0x18c] sm:$0xff]
    %v1449 = vld [vmem:[#allocation5 + $0x194] sm:$0xf]
    %v1450 = vld [vmem:[#allocation5 + $0x198] sm:$0xff]
    %v1451 = vld [vmem:[#allocation5 + $0x1a0] sm:$0xf]
    %v1452 = vld [vmem:[#allocation5 + $0x1a4] sm:$0xff]
    %v1453 = vld [vmem:[#allocation5 + $0x1ac] sm:$0xf]
    %v1454 = vld [vmem:[#allocation5 + $0x1b0] sm:$0xff]
    %v1455 = vld [vmem:[#allocation5 + $0x1b8] sm:$0xf]
    %v1456 = vld [vmem:[#allocation5 + $0x1bc] sm:$0xff]
    %v1457 = vld [vmem:[#allocation5 + $0x1c4] sm:$0xf]
    %v1458 = vld [vmem:[#allocation5 + $0x1c8] sm:$0xff]
    %v1459 = vld [vmem:[#allocation5 + $0x1d0] sm:$0xf]
    %v1460 = vld [vmem:[#allocation5 + $0x1d4] sm:$0xff]
    %v1461 = vld [vmem:[#allocation5 + $0x1dc] sm:$0xf]
    %v1462 = vld [vmem:[#allocation5 + $0x1e0] sm:$0xff]
    %v1463 = vld [vmem:[#allocation5 + $0x1e8] sm:$0xf]
    %v1464 = vld [vmem:[#allocation5 + $0x1ec] sm:$0xff]
    %v1465 = vld [vmem:[#allocation5 + $0x1f4] sm:$0xf]
    %v1466 = vld [vmem:[#allocation5 + $0x1f8] sm:$0xff]
    %v1467 = vld [vmem:[#allocation5 + $0x200] sm:$0xf]
    %v1468 = vld [vmem:[#allocation5 + $0x204] sm:$0xff]
    %v1469 = vld [vmem:[#allocation5 + $0x20c] sm:$0xf]
    %v1470 = vld [vmem:[#allocation5 + $0x210] sm:$0xff]
    %v1471 = vld [vmem:[#allocation5 + $0x218] sm:$0xf]
    %v1472 = vld [vmem:[#allocation5 + $0x21c] sm:$0xff]
    %v1473 = vld [vmem:[#allocation5 + $0x224] sm:$0xf]
    %v1474 = vld [vmem:[#allocation5 + $0x228] sm:$0xff]
    %v1475 = vld [vmem:[#allocation5 + $0x230] sm:$0xf]
    %v1476 = vld [vmem:[#allocation5 + $0x234] sm:$0xff]
    %v1477 = vld [vmem:[#allocation5 + $0x23c] sm:$0xf]
    %v1478 = vld [vmem:[#allocation5 + $0x240] sm:$0xff]
    %v1479 = vld [vmem:[#allocation5 + $0x248] sm:$0xf]
    %v1480 = vld [vmem:[#allocation5 + $0x24c] sm:$0xff]
    %v1481 = vld [vmem:[#allocation5 + $0x254] sm:$0xf]
    %v1482 = vld [vmem:[#allocation5 + $0x258] sm:$0xff]
    %v1483 = vld [vmem:[#allocation5 + $0x260] sm:$0xf]
    %v1484 = vld [vmem:[#allocation5 + $0x264] sm:$0xff]
    %v1485 = vld [vmem:[#allocation5 + $0x26c] sm:$0xf]
    %v1486 = vld [vmem:[#allocation5 + $0x270] sm:$0xff]
    %v1487 = vld [vmem:[#allocation5 + $0x278] sm:$0xf]
    %v1488 = vld [vmem:[#allocation5 + $0x27c] sm:$0xff]
    %v1489 = vld [vmem:[#allocation5 + $0x284] sm:$0xf]
    %v1490 = vld [vmem:[#allocation5 + $0x288] sm:$0xff]
    %v1491 = vld [vmem:[#allocation5 + $0x290] sm:$0xf]
    %v1492 = vld [vmem:[#allocation5 + $0x294] sm:$0xff]
    %v1493 = vld [vmem:[#allocation5 + $0x29c] sm:$0xf]
    %v1494 = vld [vmem:[#allocation5 + $0x2a0] sm:$0xff]
    %v1495 = vld [vmem:[#allocation5 + $0x2a8] sm:$0xf]
    %v1496 = vld [vmem:[#allocation5 + $0x2ac] sm:$0xff]
    %v1497 = vld [vmem:[#allocation5 + $0x2b4] sm:$0xf]
    %v1498 = vld [vmem:[#allocation5 + $0x2b8] sm:$0xff]
    %v1499 = vld [vmem:[#allocation5 + $0x2c0] sm:$0xf]
    %v1500 = vld [vmem:[#allocation5 + $0x2c4] sm:$0xff]
    %v1501 = vld [vmem:[#allocation5 + $0x2cc] sm:$0xf]
    %v1502 = vld [vmem:[#allocation5 + $0x2d0] sm:$0xff]
    %v1503 = vld [vmem:[#allocation5 + $0x2d8] sm:$0xf]
    %v1504 = vld [vmem:[#allocation5 + $0x2dc] sm:$0xff]
    %v1505 = vld [vmem:[#allocation5 + $0x2e4] sm:$0xf]
    %v1506 = vld [vmem:[#allocation5 + $0x2e8] sm:$0xff]
    %v1507 = vld [vmem:[#allocation5 + $0x2f0] sm:$0xf]
    %v1508 = vld [vmem:[#allocation5 + $0x2f4] sm:$0xff]
    %v1509 = vld [vmem:[#allocation5 + $0x2fc] sm:$0xf]
    %v1510 = vld [vmem:[%s10] sm:$0x7]
    %v1512 = vperm.slane %v1510, 0
    %v1513 = vperm.slane %v1510, 1
    %v1514 = vperm.slane %v1510, 2
    %v1646 = vunpack.c.l.b16 %v1382
    %v1647 = vunpack.c.h.b16 %v1382
    %v1648 = vunpack.c.l.b16 %v1383
    %v1649 = vunpack.c.l.b16 %v1384
    %v1650 = vunpack.c.h.b16 %v1384
    %v1651 = vunpack.c.l.b16 %v1385
    %v1652 = vunpack.c.l.b16 %v1386
    %v1653 = vunpack.c.h.b16 %v1386
    %v1654 = vunpack.c.l.b16 %v1387
    %v1655 = vunpack.c.l.b16 %v1388
    %v1656 = vunpack.c.h.b16 %v1388
    %v1657 = vunpack.c.l.b16 %v1389
    %v1658 = vunpack.c.l.b16 %v1390
    %v1659 = vunpack.c.h.b16 %v1390
    %v1660 = vunpack.c.l.b16 %v1391
    %v1661 = vunpack.c.l.b16 %v1392
    %v1662 = vunpack.c.h.b16 %v1392
    %v1663 = vunpack.c.l.b16 %v1393
    %v1664 = vunpack.c.l.b16 %v1394
    %v1665 = vunpack.c.h.b16 %v1394
    %v1666 = vunpack.c.l.b16 %v1395
    %v1667 = vunpack.c.l.b16 %v1396
    %v1668 = vunpack.c.h.b16 %v1396
    %v1669 = vunpack.c.l.b16 %v1397
    %v1670 = vunpack.c.l.b16 %v1398
    %v1671 = vunpack.c.h.b16 %v1398
    %v1672 = vunpack.c.l.b16 %v1399
    %v1673 = vunpack.c.l.b16 %v1400
    %v1674 = vunpack.c.h.b16 %v1400
    %v1675 = vunpack.c.l.b16 %v1401
    %v1676 = vunpack.c.l.b16 %v1402
    %v1677 = vunpack.c.h.b16 %v1402
    %v1678 = vunpack.c.l.b16 %v1403
    %v1679 = vunpack.c.l.b16 %v1404
    %v1680 = vunpack.c.h.b16 %v1404
    %v1681 = vunpack.c.l.b16 %v1405
    %v1682 = vunpack.c.l.b16 %v1406
    %v1683 = vunpack.c.h.b16 %v1406
    %v1684 = vunpack.c.l.b16 %v1407
    %v1685 = vunpack.c.l.b16 %v1408
    %v1686 = vunpack.c.h.b16 %v1408
    %v1687 = vunpack.c.l.b16 %v1409
    %v1688 = vunpack.c.l.b16 %v1410
    %v1689 = vunpack.c.h.b16 %v1410
    %v1690 = vunpack.c.l.b16 %v1411
    %v1691 = vunpack.c.l.b16 %v1412
    %v1692 = vunpack.c.h.b16 %v1412
    %v1693 = vunpack.c.l.b16 %v1413
    %v1694 = vunpack.c.l.b16 %v1414
    %v1695 = vunpack.c.h.b16 %v1414
    %v1696 = vunpack.c.l.b16 %v1415
    %v1697 = vunpack.c.l.b16 %v1416
    %v1698 = vunpack.c.h.b16 %v1416
    %v1699 = vunpack.c.l.b16 %v1417
    %v1700 = vunpack.c.l.b16 %v1418
    %v1701 = vunpack.c.h.b16 %v1418
    %v1702 = vunpack.c.l.b16 %v1419
    %v1703 = vunpack.c.l.b16 %v1420
    %v1704 = vunpack.c.h.b16 %v1420
    %v1705 = vunpack.c.l.b16 %v1421
    %v1706 = vunpack.c.l.b16 %v1422
    %v1707 = vunpack.c.h.b16 %v1422
    %v1708 = vunpack.c.l.b16 %v1423
    %v1709 = vunpack.c.l.b16 %v1424
    %v1710 = vunpack.c.h.b16 %v1424
    %v1711 = vunpack.c.l.b16 %v1425
    %v1712 = vunpack.c.l.b16 %v1426
    %v1713 = vunpack.c.h.b16 %v1426
    %v1714 = vunpack.c.l.b16 %v1427
    %v1715 = vunpack.c.l.b16 %v1428
    %v1716 = vunpack.c.h.b16 %v1428
    %v1717 = vunpack.c.l.b16 %v1429
    %v1718 = vunpack.c.l.b16 %v1430
    %v1719 = vunpack.c.h.b16 %v1430
    %v1720 = vunpack.c.l.b16 %v1431
    %v1721 = vunpack.c.l.b16 %v1432
    %v1722 = vunpack.c.h.b16 %v1432
    %v1723 = vunpack.c.l.b16 %v1433
    %v1724 = vunpack.c.l.b16 %v1434
    %v1725 = vunpack.c.h.b16 %v1434
    %v1726 = vunpack.c.l.b16 %v1435
    %v1727 = vunpack.c.l.b16 %v1436
    %v1728 = vunpack.c.h.b16 %v1436
    %v1729 = vunpack.c.l.b16 %v1437
    %v1730 = vunpack.c.l.b16 %v1438
    %v1731 = vunpack.c.h.b16 %v1438
    %v1732 = vunpack.c.l.b16 %v1439
    %v1733 = vunpack.c.l.b16 %v1440
    %v1734 = vunpack.c.h.b16 %v1440
    %v1735 = vunpack.c.l.b16 %v1441
    %v1736 = vunpack.c.l.b16 %v1442
    %v1737 = vunpack.c.h.b16 %v1442
    %v1738 = vunpack.c.l.b16 %v1443
    %v1739 = vunpack.c.l.b16 %v1444
    %v1740 = vunpack.c.h.b16 %v1444
    %v1741 = vunpack.c.l.b16 %v1445
    %v1742 = vunpack.c.l.b16 %v1446
    %v1743 = vunpack.c.h.b16 %v1446
    %v1744 = vunpack.c.l.b16 %v1447
    %v1745 = vunpack.c.l.b16 %v1448
    %v1746 = vunpack.c.h.b16 %v1448
    %v1747 = vunpack.c.l.b16 %v1449
    %v1748 = vunpack.c.l.b16 %v1450
    %v1749 = vunpack.c.h.b16 %v1450
    %v1750 = vunpack.c.l.b16 %v1451
    %v1751 = vunpack.c.l.b16 %v1452
    %v1752 = vunpack.c.h.b16 %v1452
    %v1753 = vunpack.c.l.b16 %v1453
    %v1754 = vunpack.c.l.b16 %v1454
    %v1755 = vunpack.c.h.b16 %v1454
    %v1756 = vunpack.c.l.b16 %v1455
    %v1757 = vunpack.c.l.b16 %v1456
    %v1758 = vunpack.c.h.b16 %v1456
    %v1759 = vunpack.c.l.b16 %v1457
    %v1760 = vunpack.c.l.b16 %v1458
    %v1761 = vunpack.c.h.b16 %v1458
    %v1762 = vunpack.c.l.b16 %v1459
    %v1763 = vunpack.c.l.b16 %v1460
    %v1764 = vunpack.c.h.b16 %v1460
    %v1765 = vunpack.c.l.b16 %v1461
    %v1766 = vunpack.c.l.b16 %v1462
    %v1767 = vunpack.c.h.b16 %v1462
    %v1768 = vunpack.c.l.b16 %v1463
    %v1769 = vunpack.c.l.b16 %v1464
    %v1770 = vunpack.c.h.b16 %v1464
    %v1771 = vunpack.c.l.b16 %v1465
    %v1772 = vunpack.c.l.b16 %v1466
    %v1773 = vunpack.c.h.b16 %v1466
    %v1774 = vunpack.c.l.b16 %v1467
    %v1775 = vunpack.c.l.b16 %v1468
    %v1776 = vunpack.c.h.b16 %v1468
    %v1777 = vunpack.c.l.b16 %v1469
    %v1778 = vunpack.c.l.b16 %v1470
    %v1779 = vunpack.c.h.b16 %v1470
    %v1780 = vunpack.c.l.b16 %v1471
    %v1781 = vunpack.c.l.b16 %v1472
    %v1782 = vunpack.c.h.b16 %v1472
    %v1783 = vunpack.c.l.b16 %v1473
    %v1784 = vunpack.c.l.b16 %v1474
    %v1785 = vunpack.c.h.b16 %v1474
    %v1786 = vunpack.c.l.b16 %v1475
    %v1787 = vunpack.c.l.b16 %v1476
    %v1788 = vunpack.c.h.b16 %v1476
    %v1789 = vunpack.c.l.b16 %v1477
    %v1790 = vunpack.c.l.b16 %v1478
    %v1791 = vunpack.c.h.b16 %v1478
    %v1792 = vunpack.c.l.b16 %v1479
    %v1793 = vunpack.c.l.b16 %v1480
    %v1794 = vunpack.c.h.b16 %v1480
    %v1795 = vunpack.c.l.b16 %v1481
    %v1796 = vunpack.c.l.b16 %v1482
    %v1797 = vunpack.c.h.b16 %v1482
    %v1798 = vunpack.c.l.b16 %v1483
    %v1799 = vunpack.c.l.b16 %v1484
    %v1800 = vunpack.c.h.b16 %v1484
    %v1801 = vunpack.c.l.b16 %v1485
    %v1802 = vunpack.c.l.b16 %v1486
    %v1803 = vunpack.c.h.b16 %v1486
    %v1804 = vunpack.c.l.b16 %v1487
    %v1805 = vunpack.c.l.b16 %v1488
    %v1806 = vunpack.c.h.b16 %v1488
    %v1807 = vunpack.c.l.b16 %v1489
    %v1808 = vunpack.c.l.b16 %v1490
    %v1809 = vunpack.c.h.b16 %v1490
    %v1810 = vunpack.c.l.b16 %v1491
    %v1811 = vunpack.c.l.b16 %v1492
    %v1812 = vunpack.c.h.b16 %v1492
    %v1813 = vunpack.c.l.b16 %v1493
    %v1814 = vunpack.c.l.b16 %v1494
    %v1815 = vunpack.c.h.b16 %v1494
    %v1816 = vunpack.c.l.b16 %v1495
    %v1817 = vunpack.c.l.b16 %v1496
    %v1818 = vunpack.c.h.b16 %v1496
    %v1819 = vunpack.c.l.b16 %v1497
    %v1820 = vunpack.c.l.b16 %v1498
    %v1821 = vunpack.c.h.b16 %v1498
    %v1822 = vunpack.c.l.b16 %v1499
    %v1823 = vunpack.c.l.b16 %v1500
    %v1824 = vunpack.c.h.b16 %v1500
    %v1825 = vunpack.c.l.b16 %v1501
    %v1826 = vunpack.c.l.b16 %v1502
    %v1827 = vunpack.c.h.b16 %v1502
    %v1828 = vunpack.c.l.b16 %v1503
    %v1829 = vunpack.c.l.b16 %v1504
    %v1830 = vunpack.c.h.b16 %v1504
    %v1831 = vunpack.c.l.b16 %v1505
    %v1832 = vunpack.c.l.b16 %v1506
    %v1833 = vunpack.c.h.b16 %v1506
    %v1834 = vunpack.c.l.b16 %v1507
    %v1835 = vunpack.c.l.b16 %v1508
    %v1836 = vunpack.c.h.b16 %v1508
    %v1837 = vunpack.c.l.b16 %v1509
    %v1838 = vpack.c.b16 %v1649, %v1646
    %v1839 = vpack.c.b16 %v1650, %v1647
    %v1840 = vpack.c.b16 %v1651, %v1648
    %v1841 = vpack.c.b16 %v1655, %v1652
    %v1842 = vpack.c.b16 %v1656, %v1653
    %v1843 = vpack.c.b16 %v1657, %v1654
    %v1844 = vpack.c.b16 %v1661, %v1658
    %v1845 = vpack.c.b16 %v1662, %v1659
    %v1846 = vpack.c.b16 %v1663, %v1660
    %v1847 = vpack.c.b16 %v1667, %v1664
    %v1848 = vpack.c.b16 %v1668, %v1665
    %v1849 = vpack.c.b16 %v1669, %v1666
    %v1850 = vpack.c.b16 %v1673, %v1670
    %v1851 = vpack.c.b16 %v1674, %v1671
    %v1852 = vpack.c.b16 %v1675, %v1672
    %v1853 = vpack.c.b16 %v1679, %v1676
    %v1854 = vpack.c.b16 %v1680, %v1677
    %v1855 = vpack.c.b16 %v1681, %v1678
    %v1856 = vpack.c.b16 %v1685, %v1682
    %v1857 = vpack.c.b16 %v1686, %v1683
    %v1858 = vpack.c.b16 %v1687, %v1684
    %v1859 = vpack.c.b16 %v1691, %v1688
    %v1860 = vpack.c.b16 %v1692, %v1689
    %v1861 = vpack.c.b16 %v1693, %v1690
    %v1862 = vpack.c.b16 %v1697, %v1694
    %v1863 = vpack.c.b16 %v1698, %v1695
    %v1864 = vpack.c.b16 %v1699, %v1696
    %v1865 = vpack.c.b16 %v1703, %v1700
    %v1866 = vpack.c.b16 %v1704, %v1701
    %v1867 = vpack.c.b16 %v1705, %v1702
    %v1868 = vpack.c.b16 %v1709, %v1706
    %v1869 = vpack.c.b16 %v1710, %v1707
    %v1870 = vpack.c.b16 %v1711, %v1708
    %v1871 = vpack.c.b16 %v1715, %v1712
    %v1872 = vpack.c.b16 %v1716, %v1713
    %v1873 = vpack.c.b16 %v1717, %v1714
    %v1874 = vpack.c.b16 %v1721, %v1718
    %v1875 = vpack.c.b16 %v1722, %v1719
    %v1876 = vpack.c.b16 %v1723, %v1720
    %v1877 = vpack.c.b16 %v1727, %v1724
    %v1878 = vpack.c.b16 %v1728, %v1725
    %v1879 = vpack.c.b16 %v1729, %v1726
    %v1880 = vpack.c.b16 %v1733, %v1730
    %v1881 = vpack.c.b16 %v1734, %v1731
    %v1882 = vpack.c.b16 %v1735, %v1732
    %v1883 = vpack.c.b16 %v1739, %v1736
    %v1884 = vpack.c.b16 %v1740, %v1737
    %v1885 = vpack.c.b16 %v1741, %v1738
    %v1886 = vpack.c.b16 %v1745, %v1742
    %v1887 = vpack.c.b16 %v1746, %v1743
    %v1888 = vpack.c.b16 %v1747, %v1744
    %v1889 = vpack.c.b16 %v1751, %v1748
    %v1890 = vpack.c.b16 %v1752, %v1749
    %v1891 = vpack.c.b16 %v1753, %v1750
    %v1892 = vpack.c.b16 %v1757, %v1754
    %v1893 = vpack.c.b16 %v1758, %v1755
    %v1894 = vpack.c.b16 %v1759, %v1756
    %v1895 = vpack.c.b16 %v1763, %v1760
    %v1896 = vpack.c.b16 %v1764, %v1761
    %v1897 = vpack.c.b16 %v1765, %v1762
    %v1898 = vpack.c.b16 %v1769, %v1766
    %v1899 = vpack.c.b16 %v1770, %v1767
    %v1900 = vpack.c.b16 %v1771, %v1768
    %v1901 = vpack.c.b16 %v1775, %v1772
    %v1902 = vpack.c.b16 %v1776, %v1773
    %v1903 = vpack.c.b16 %v1777, %v1774
    %v1904 = vpack.c.b16 %v1781, %v1778
    %v1905 = vpack.c.b16 %v1782, %v1779
    %v1906 = vpack.c.b16 %v1783, %v1780
    %v1907 = vpack.c.b16 %v1787, %v1784
    %v1908 = vpack.c.b16 %v1788, %v1785
    %v1909 = vpack.c.b16 %v1789, %v1786
    %v1910 = vpack.c.b16 %v1793, %v1790
    %v1911 = vpack.c.b16 %v1794, %v1791
    %v1912 = vpack.c.b16 %v1795, %v1792
    %v1913 = vpack.c.b16 %v1799, %v1796
    %v1914 = vpack.c.b16 %v1800, %v1797
    %v1915 = vpack.c.b16 %v1801, %v1798
    %v1916 = vpack.c.b16 %v1805, %v1802
    %v1917 = vpack.c.b16 %v1806, %v1803
    %v1918 = vpack.c.b16 %v1807, %v1804
    %v1919 = vpack.c.b16 %v1811, %v1808
    %v1920 = vpack.c.b16 %v1812, %v1809
    %v1921 = vpack.c.b16 %v1813, %v1810
    %v1922 = vpack.c.b16 %v1817, %v1814
    %v1923 = vpack.c.b16 %v1818, %v1815
    %v1924 = vpack.c.b16 %v1819, %v1816
    %v1925 = vpack.c.b16 %v1823, %v1820
    %v1926 = vpack.c.b16 %v1824, %v1821
    %v1927 = vpack.c.b16 %v1825, %v1822
    %v1928 = vpack.c.b16 %v1829, %v1826
    %v1929 = vpack.c.b16 %v1830, %v1827
    %v1930 = vpack.c.b16 %v1831, %v1828
    %v1931 = vpack.c.b16 %v1835, %v1832
    %v1932 = vpack.c.b16 %v1836, %v1833
    %v1933 = vpack.c.b16 %v1837, %v1834
    %2030 = vmatpush.bf16.msra.mxu0 %v1859
    %2031 = vmatpush.bf16.msra.mxu0 %v1856
    %2032 = vmatpush.bf16.msra.mxu0 %v1853
    %2033 = vmatpush.bf16.msra.mxu0 %v1850
    %2034 = vmatpush.bf16.msra.mxu0 %v1847
    %2035 = vmatpush.bf16.msra.mxu0 %v1844
    %2036 = vmatpush.bf16.msra.mxu0 %v1841
    %2037 = vmatpush.bf16.msra.mxu0 %v1838
    %2038 = vmatmul.bf16.gmra.mxu0 %v1192
    %v2039 = vpop.f32.mrf.mxu0
    %v2040 = vadd.f32 %v1512, %v2039
    %v2041 = vpop.f32.mrf.mxu0
    %2042 = vdwg.mxu0
    %2043 = vmatpush.bf16.msra.mxu0 %v1883
    %2044 = vmatpush.bf16.msra.mxu0 %v1880
    %2045 = vmatpush.bf16.msra.mxu0 %v1877
    %2046 = vmatpush.bf16.msra.mxu0 %v1874
    %2047 = vmatpush.bf16.msra.mxu0 %v1871
    %2048 = vmatpush.bf16.msra.mxu0 %v1868
    %2049 = vmatpush.bf16.msra.mxu0 %v1865
    %2050 = vmatpush.bf16.msra.mxu0 %v1862
    %2051 = vmatmul.bf16.gmra.mxu0 %v1193
    %v2052 = vpop.f32.mrf.mxu0
    %v2053 = vadd.f32 %v2040, %v2052
    %v2054 = vpop.f32.mrf.mxu0
    %2055 = vdwg.mxu0
    %2056 = vmatpush.bf16.msra.mxu0 %v1907
    %2057 = vmatpush.bf16.msra.mxu0 %v1904
    %2058 = vmatpush.bf16.msra.mxu0 %v1901
    %2059 = vmatpush.bf16.msra.mxu0 %v1898
    %2060 = vmatpush.bf16.msra.mxu0 %v1895
    %2061 = vmatpush.bf16.msra.mxu0 %v1892
    %2062 = vmatpush.bf16.msra.mxu0 %v1889
    %2063 = vmatpush.bf16.msra.mxu0 %v1886
    %2064 = vmatmul.bf16.gmra.mxu0 %v1194
    %v2065 = vpop.f32.mrf.mxu0
    %v2066 = vadd.f32 %v2053, %v2065
    %v2067 = vpop.f32.mrf.mxu0
    %2068 = vdwg.mxu0
    %2069 = vmatpush.bf16.msra.mxu0 %v1931
    %2070 = vmatpush.bf16.msra.mxu0 %v1928
    %2071 = vmatpush.bf16.msra.mxu0 %v1925
    %2072 = vmatpush.bf16.msra.mxu0 %v1922
    %2073 = vmatpush.bf16.msra.mxu0 %v1919
    %2074 = vmatpush.bf16.msra.mxu0 %v1916
    %2075 = vmatpush.bf16.msra.mxu0 %v1913
    %2076 = vmatpush.bf16.msra.mxu0 %v1910
    %2077 = vmatmul.bf16.gmra.mxu0 %v1195
    %v2078 = vpop.f32.mrf.mxu0
    %v2079 = vadd.f32 %v2066, %v2078
    %v2080 = vpop.f32.mrf.mxu0
    %2081 = vdwg.mxu0
    %2082 = vmatpush.bf16.msra.mxu0 %v1860
    %2083 = vmatpush.bf16.msra.mxu0 %v1857
    %2084 = vmatpush.bf16.msra.mxu0 %v1854
    %2085 = vmatpush.bf16.msra.mxu0 %v1851
    %2086 = vmatpush.bf16.msra.mxu0 %v1848
    %2087 = vmatpush.bf16.msra.mxu0 %v1845
    %2088 = vmatpush.bf16.msra.mxu0 %v1842
    %2089 = vmatpush.bf16.msra.mxu0 %v1839
    %2090 = vmatmul.bf16.gmra.mxu0 %v1192
    %v2091 = vpop.f32.mrf.mxu0
    %v2092 = vadd.f32 %v1513, %v2091
    %v2093 = vpop.f32.mrf.mxu0
    %2094 = vdwg.mxu0
    %2095 = vmatpush.bf16.msra.mxu0 %v1884
    %2096 = vmatpush.bf16.msra.mxu0 %v1881
    %2097 = vmatpush.bf16.msra.mxu0 %v1878
    %2098 = vmatpush.bf16.msra.mxu0 %v1875
    %2099 = vmatpush.bf16.msra.mxu0 %v1872
    %2100 = vmatpush.bf16.msra.mxu0 %v1869
    %2101 = vmatpush.bf16.msra.mxu0 %v1866
    %2102 = vmatpush.bf16.msra.mxu0 %v1863
    %2103 = vmatmul.bf16.gmra.mxu0 %v1193
    %v2104 = vpop.f32.mrf.mxu0
    %v2105 = vadd.f32 %v2092, %v2104
    %v2106 = vpop.f32.mrf.mxu0
    %2107 = vdwg.mxu0
    %2108 = vmatpush.bf16.msra.mxu0 %v1908
    %2109 = vmatpush.bf16.msra.mxu0 %v1905
    %2110 = vmatpush.bf16.msra.mxu0 %v1902
    %2111 = vmatpush.bf16.msra.mxu0 %v1899
    %2112 = vmatpush.bf16.msra.mxu0 %v1896
    %2113 = vmatpush.bf16.msra.mxu0 %v1893
    %2114 = vmatpush.bf16.msra.mxu0 %v1890
    %2115 = vmatpush.bf16.msra.mxu0 %v1887
    %2116 = vmatmul.bf16.gmra.mxu0 %v1194
    %v2117 = vpop.f32.mrf.mxu0
    %v2118 = vadd.f32 %v2105, %v2117
    %v2119 = vpop.f32.mrf.mxu0
    %2120 = vdwg.mxu0
    %2121 = vmatpush.bf16.msra.mxu0 %v1932
    %2122 = vmatpush.bf16.msra.mxu0 %v1929
    %2123 = vmatpush.bf16.msra.mxu0 %v1926
    %2124 = vmatpush.bf16.msra.mxu0 %v1923
    %2125 = vmatpush.bf16.msra.mxu0 %v1920
    %2126 = vmatpush.bf16.msra.mxu0 %v1917
    %2127 = vmatpush.bf16.msra.mxu0 %v1914
    %2128 = vmatpush.bf16.msra.mxu0 %v1911
    %2129 = vmatmul.bf16.gmra.mxu0 %v1195
    %v2130 = vpop.f32.mrf.mxu0
    %v2131 = vadd.f32 %v2118, %v2130
    %v2132 = vpop.f32.mrf.mxu0
    %2133 = vdwg.mxu0
    %2134 = vmatpush.bf16.msra.mxu0 %v1861
    %2135 = vmatpush.bf16.msra.mxu0 %v1858
    %2136 = vmatpush.bf16.msra.mxu0 %v1855
    %2137 = vmatpush.bf16.msra.mxu0 %v1852
    %2138 = vmatpush.bf16.msra.mxu0 %v1849
    %2139 = vmatpush.bf16.msra.mxu0 %v1846
    %2140 = vmatpush.bf16.msra.mxu0 %v1843
    %2141 = vmatpush.bf16.msra.mxu0 %v1840
    %2142 = vmatmul.bf16.gmra.mxu0 %v1192
    %v2143 = vpop.f32.mrf.mxu0
    %v2144 = vadd.f32 %v1514, %v2143
    %v2145 = vpop.f32.mrf.mxu0
    %2146 = vdwg.mxu0
    %2147 = vmatpush.bf16.msra.mxu0 %v1885
    %2148 = vmatpush.bf16.msra.mxu0 %v1882
    %2149 = vmatpush.bf16.msra.mxu0 %v1879
    %2150 = vmatpush.bf16.msra.mxu0 %v1876
    %2151 = vmatpush.bf16.msra.mxu0 %v1873
    %2152 = vmatpush.bf16.msra.mxu0 %v1870
    %2153 = vmatpush.bf16.msra.mxu0 %v1867
    %2154 = vmatpush.bf16.msra.mxu0 %v1864
    %2155 = vmatmul.bf16.gmra.mxu0 %v1193
    %v2156 = vpop.f32.mrf.mxu0
    %v2157 = vadd.f32 %v2144, %v2156
    %v2158 = vpop.f32.mrf.mxu0
    %2159 = vdwg.mxu0
    %2160 = vmatpush.bf16.msra.mxu0 %v1909
    %2161 = vmatpush.bf16.msra.mxu0 %v1906
    %2162 = vmatpush.bf16.msra.mxu0 %v1903
    %2163 = vmatpush.bf16.msra.mxu0 %v1900
    %2164 = vmatpush.bf16.msra.mxu0 %v1897
    %2165 = vmatpush.bf16.msra.mxu0 %v1894
    %2166 = vmatpush.bf16.msra.mxu0 %v1891
    %2167 = vmatpush.bf16.msra.mxu0 %v1888
    %2168 = vmatmul.bf16.gmra.mxu0 %v1194
    %v2169 = vpop.f32.mrf.mxu0
    %v2170 = vadd.f32 %v2157, %v2169
    %v2171 = vpop.f32.mrf.mxu0
    %2172 = vdwg.mxu0
    %2173 = vmatpush.bf16.msra.mxu0 %v1933
    %2174 = vmatpush.bf16.msra.mxu0 %v1930
    %2175 = vmatpush.bf16.msra.mxu0 %v1927
    %2176 = vmatpush.bf16.msra.mxu0 %v1924
    %2177 = vmatpush.bf16.msra.mxu0 %v1921
    %2178 = vmatpush.bf16.msra.mxu0 %v1918
    %2179 = vmatpush.bf16.msra.mxu0 %v1915
    %2180 = vmatpush.bf16.msra.mxu0 %v1912
    %2181 = vmatmul.bf16.gmra.mxu0 %v1195
    %v2182 = vpop.f32.mrf.mxu0
    %v2183 = vadd.f32 %v2170, %v2182
    %v2184 = vpop.f32.mrf.mxu0
    %2185 = vdwg.mxu0
    %vm2186 = vcmp.ge.f32.partialorder %v2079, 0.0
    %vm2187 = vcmp.ge.f32.partialorder %v2131, 0.0
    %vm2188 = vcmp.ge.f32.partialorder %v2183, 0.0
    %v2189 = vmul.f32 %v2079, 0.01
    %v2190 = vmul.f32 %v2131, 0.01
    %v2191 = vmul.f32 %v2183, 0.01
    %v2192 = vsel %vm2186, %v2079, %v2189
    %v2193 = vsel %vm2187, %v2131, %v2190
    %v2194 = vsel %vm2188, %v2183, %v2191
    %v2195 = vpack.c.bf16 %v2192, %v2192
    %v2196 = vpack.c.bf16 %v2193, %v2193
    %v2197 = vpack.c.bf16 %v2194, %v2194
    %v2198 = vld [vmem:[%s11] sm:$0xf]
    %v2199 = vld [vmem:[%s11 + $0x4] sm:$0xf]
    %v2200 = vld [vmem:[%s11 + $0x8] sm:$0xf]
    %v2201 = vld [vmem:[%s11 + $0xc] sm:$0xf]
    %v2202 = vld [vmem:[%s11 + $0x10] sm:$0xf]
    %v2203 = vld [vmem:[%s11 + $0x14] sm:$0xf]
    %v2204 = vld [vmem:[%s11 + $0x18] sm:$0xf]
    %v2205 = vld [vmem:[%s11 + $0x1c] sm:$0xf]
    %v2206 = vld [vmem:[%s11 + $0x20] sm:$0xf]
    %v2207 = vld [vmem:[%s11 + $0x24] sm:$0xf]
    %v2208 = vld [vmem:[%s11 + $0x28] sm:$0xf]
    %v2209 = vld [vmem:[%s11 + $0x2c] sm:$0xf]
    %v2210 = vld [vmem:[%s11 + $0x30] sm:$0xf]
    %v2211 = vld [vmem:[%s11 + $0x34] sm:$0xf]
    %v2212 = vld [vmem:[%s11 + $0x38] sm:$0xf]
    %v2213 = vld [vmem:[%s11 + $0x3c] sm:$0xf]
    %v2214 = vld [vmem:[%s11 + $0x40] sm:$0xf]
    %v2215 = vld [vmem:[%s11 + $0x44] sm:$0xf]
    %v2216 = vld [vmem:[%s11 + $0x48] sm:$0xf]
    %v2217 = vld [vmem:[%s11 + $0x4c] sm:$0xf]
    %v2218 = vld [vmem:[%s11 + $0x50] sm:$0xf]
    %v2219 = vld [vmem:[%s11 + $0x54] sm:$0xf]
    %v2220 = vld [vmem:[%s11 + $0x58] sm:$0xf]
    %v2221 = vld [vmem:[%s11 + $0x5c] sm:$0xf]
    %v2222 = vld [vmem:[%s11 + $0x60] sm:$0xf]
    %v2223 = vld [vmem:[%s11 + $0x64] sm:$0xf]
    %v2224 = vld [vmem:[%s11 + $0x68] sm:$0xf]
    %v2225 = vld [vmem:[%s11 + $0x6c] sm:$0xf]
    %v2226 = vld [vmem:[%s11 + $0x70] sm:$0xf]
    %v2227 = vld [vmem:[%s11 + $0x74] sm:$0xf]
    %v2228 = vld [vmem:[%s11 + $0x78] sm:$0xf]
    %v2229 = vld [vmem:[%s11 + $0x7c] sm:$0xf]
    %v2230 = vld [vmem:[%s11 + $0x80] sm:$0xf]
    %v2231 = vld [vmem:[%s11 + $0x84] sm:$0xf]
    %v2232 = vld [vmem:[%s11 + $0x88] sm:$0xf]
    %v2233 = vld [vmem:[%s11 + $0x8c] sm:$0xf]
    %v2234 = vld [vmem:[%s11 + $0x90] sm:$0xf]
    %v2235 = vld [vmem:[%s11 + $0x94] sm:$0xf]
    %v2236 = vld [vmem:[%s11 + $0x98] sm:$0xf]
    %v2237 = vld [vmem:[%s11 + $0x9c] sm:$0xf]
    %v2238 = vld [vmem:[%s11 + $0xa0] sm:$0xf]
    %v2239 = vld [vmem:[%s11 + $0xa4] sm:$0xf]
    %v2240 = vld [vmem:[%s11 + $0xa8] sm:$0xf]
    %v2241 = vld [vmem:[%s11 + $0xac] sm:$0xf]
    %v2242 = vld [vmem:[%s11 + $0xb0] sm:$0xf]
    %v2243 = vld [vmem:[%s11 + $0xb4] sm:$0xf]
    %v2244 = vld [vmem:[%s11 + $0xb8] sm:$0xf]
    %v2245 = vld [vmem:[%s11 + $0xbc] sm:$0xf]
    %v2246 = vld [vmem:[%s12] sm:$0x1]
    %v2248 = vperm.slane %v2246, 0
    %v2298 = vunpack.c.l.b16 %v2198
    %v2299 = vunpack.c.l.b16 %v2199
    %v2300 = vunpack.c.l.b16 %v2200
    %v2301 = vunpack.c.l.b16 %v2201
    %v2302 = vunpack.c.l.b16 %v2202
    %v2303 = vunpack.c.l.b16 %v2203
    %v2304 = vunpack.c.l.b16 %v2204
    %v2305 = vunpack.c.l.b16 %v2205
    %v2306 = vunpack.c.l.b16 %v2206
    %v2307 = vunpack.c.l.b16 %v2207
    %v2308 = vunpack.c.l.b16 %v2208
    %v2309 = vunpack.c.l.b16 %v2209
    %v2310 = vunpack.c.l.b16 %v2210
    %v2311 = vunpack.c.l.b16 %v2211
    %v2312 = vunpack.c.l.b16 %v2212
    %v2313 = vunpack.c.l.b16 %v2213
    %v2314 = vunpack.c.l.b16 %v2214
    %v2315 = vunpack.c.l.b16 %v2215
    %v2316 = vunpack.c.l.b16 %v2216
    %v2317 = vunpack.c.l.b16 %v2217
    %v2318 = vunpack.c.l.b16 %v2218
    %v2319 = vunpack.c.l.b16 %v2219
    %v2320 = vunpack.c.l.b16 %v2220
    %v2321 = vunpack.c.l.b16 %v2221
    %v2322 = vunpack.c.l.b16 %v2222
    %v2323 = vunpack.c.l.b16 %v2223
    %v2324 = vunpack.c.l.b16 %v2224
    %v2325 = vunpack.c.l.b16 %v2225
    %v2326 = vunpack.c.l.b16 %v2226
    %v2327 = vunpack.c.l.b16 %v2227
    %v2328 = vunpack.c.l.b16 %v2228
    %v2329 = vunpack.c.l.b16 %v2229
    %v2330 = vunpack.c.l.b16 %v2230
    %v2331 = vunpack.c.l.b16 %v2231
    %v2332 = vunpack.c.l.b16 %v2232
    %v2333 = vunpack.c.l.b16 %v2233
    %v2334 = vunpack.c.l.b16 %v2234
    %v2335 = vunpack.c.l.b16 %v2235
    %v2336 = vunpack.c.l.b16 %v2236
    %v2337 = vunpack.c.l.b16 %v2237
    %v2338 = vunpack.c.l.b16 %v2238
    %v2339 = vunpack.c.l.b16 %v2239
    %v2340 = vunpack.c.l.b16 %v2240
    %v2341 = vunpack.c.l.b16 %v2241
    %v2342 = vunpack.c.l.b16 %v2242
    %v2343 = vunpack.c.l.b16 %v2243
    %v2344 = vunpack.c.l.b16 %v2244
    %v2345 = vunpack.c.l.b16 %v2245
    %v2346 = vpack.c.b16 %v2299, %v2298
    %v2347 = vpack.c.b16 %v2301, %v2300
    %v2348 = vpack.c.b16 %v2303, %v2302
    %v2349 = vpack.c.b16 %v2305, %v2304
    %v2350 = vpack.c.b16 %v2307, %v2306
    %v2351 = vpack.c.b16 %v2309, %v2308
    %v2352 = vpack.c.b16 %v2311, %v2310
    %v2353 = vpack.c.b16 %v2313, %v2312
    %v2354 = vpack.c.b16 %v2315, %v2314
    %v2355 = vpack.c.b16 %v2317, %v2316
    %v2356 = vpack.c.b16 %v2319, %v2318
    %v2357 = vpack.c.b16 %v2321, %v2320
    %v2358 = vpack.c.b16 %v2323, %v2322
    %v2359 = vpack.c.b16 %v2325, %v2324
    %v2360 = vpack.c.b16 %v2327, %v2326
    %v2361 = vpack.c.b16 %v2329, %v2328
    %v2362 = vpack.c.b16 %v2331, %v2330
    %v2363 = vpack.c.b16 %v2333, %v2332
    %v2364 = vpack.c.b16 %v2335, %v2334
    %v2365 = vpack.c.b16 %v2337, %v2336
    %v2366 = vpack.c.b16 %v2339, %v2338
    %v2367 = vpack.c.b16 %v2341, %v2340
    %v2368 = vpack.c.b16 %v2343, %v2342
    %v2369 = vpack.c.b16 %v2345, %v2344
    %2394 = vmatpush.bf16.msra.mxu0 %v2353
    %2395 = vmatpush.bf16.msra.mxu0 %v2352
    %2396 = vmatpush.bf16.msra.mxu0 %v2351
    %2397 = vmatpush.bf16.msra.mxu0 %v2350
    %2398 = vmatpush.bf16.msra.mxu0 %v2349
    %2399 = vmatpush.bf16.msra.mxu0 %v2348
    %2400 = vmatpush.bf16.msra.mxu0 %v2347
    %2401 = vmatpush.bf16.msra.mxu0 %v2346
    %2402 = vmatmul.bf16.gmra.mxu0 %v2195
    %v2403 = vpop.f32.mrf.mxu0
    %v2404 = vadd.f32 %v2248, %v2403
    %v2405 = vpop.f32.mrf.mxu0
    %2406 = vdwg.mxu0
    %2407 = vmatpush.bf16.msra.mxu0 %v2361
    %2408 = vmatpush.bf16.msra.mxu0 %v2360
    %2409 = vmatpush.bf16.msra.mxu0 %v2359
    %2410 = vmatpush.bf16.msra.mxu0 %v2358
    %2411 = vmatpush.bf16.msra.mxu0 %v2357
    %2412 = vmatpush.bf16.msra.mxu0 %v2356
    %2413 = vmatpush.bf16.msra.mxu0 %v2355
    %2414 = vmatpush.bf16.msra.mxu0 %v2354
    %2415 = vmatmul.bf16.gmra.mxu0 %v2196
    %v2416 = vpop.f32.mrf.mxu0
    %v2417 = vadd.f32 %v2404, %v2416
    %v2418 = vpop.f32.mrf.mxu0
    %2419 = vdwg.mxu0
    %2420 = vmatpush.bf16.msra.mxu0 %v2369
    %2421 = vmatpush.bf16.msra.mxu0 %v2368
    %2422 = vmatpush.bf16.msra.mxu0 %v2367
    %2423 = vmatpush.bf16.msra.mxu0 %v2366
    %2424 = vmatpush.bf16.msra.mxu0 %v2365
    %2425 = vmatpush.bf16.msra.mxu0 %v2364
    %2426 = vmatpush.bf16.msra.mxu0 %v2363
    %2427 = vmatpush.bf16.msra.mxu0 %v2362
    %2428 = vmatmul.bf16.gmra.mxu0 %v2197
    %v2429 = vpop.f32.mrf.mxu0
    %v2430 = vadd.f32 %v2417, %v2429
    %v2431 = vpop.f32.mrf.mxu0
    %2432 = vdwg.mxu0
    %2434 = vrot.lane.b32.xlu0 %v2430, 4
    %v2435 = vpop.permute.xlu0 %2434
    %v2437 = vsel %vm1354, %v1365, %v1381
    %vm2438 = vcmask 31744
    %v2439 = vsel %vm2438, %v2437, %v2435
    %vm2440 = vcmask 72704
    %v2441 = vsel %vm2440, %v2439, 0.0
    %2442 = vst [vmem:[#allocation7] sm:$0xff] %v2441
    // Predicated region
    $region62: #{tpu_custom_call.1} parent=1 // pred_check
      _
    $region63: #{tpu_custom_call.1} parent=1 // pred_check_branch
      %2444 = sbr.rel (0) target = $region65
    $region64: #{tpu_custom_call.1} parent=1 // pred_region
      %2446 = vsyncadd [#allocation4], 0
      %s2448 = sshll.u32 [#allocation7], 4
      %s2449 = int_to_ptr.vmem [resolvable:$true] %s2448
      %s2450 = sshll.u32 %s13, 4
      %s2451 = int_to_ptr.hbm [resolvable:$true] %s2450
      %2453 = dma.vmem_to_hbm [thread:$0]  %s2449, 128, %s2451, [#allocation4]
    $region65: #{tpu_custom_call.1} parent=1 // pred_fallthru
      _
    // Predicated region
    $region66: #{tpu_custom_call.1} parent=1 // pred_check
      _
    $region67: #{tpu_custom_call.1} parent=1 // pred_check_branch
      %2455 = sbr.rel (0) target = $region69
    $region68: #{tpu_custom_call.1} parent=1 // pred_region
      %2457 = dma.done [#allocation4], 128
    $region69: #{tpu_custom_call.1} parent=1 // pred_fallthru
      _
    %2458 = vsyncpa [#allocation3], 1
    %2459 = vsyncpa [#allocation6], 1
    %2460 = vsyncpa [#allocation4], 1

</llo_original>
